<compile_context>
chip_gen: v5e
topology: v5e:2x2
jax: 0.10.0
libtpu: 0.0.40
codegen_flags: <defaults>
</compile_context>

<pallas_src>
import math

import jax
import jax.numpy as jnp
import numpy as np
from jax.experimental import pallas as pl
from jax.experimental.pallas import tpu as pltpu


# ----------------------------- small math helpers -----------------------------
def _layernorm(v, g, b, eps=1e-5):
    mu = jnp.mean(v, axis=-1, keepdims=True)
    var = jnp.mean((v - mu) ** 2, axis=-1, keepdims=True)
    return (v - mu) * jax.lax.rsqrt(var + eps) * g + b


def _gelu_new(x):
    # HF ACT2FN['gelu_new']: tanh approximation of GELU
    return 0.5 * x * (1.0 + jnp.tanh(
        jnp.sqrt(2.0 / jnp.pi) * (x + 0.044715 * x * x * x)))


# --------------------------------- the kernel ---------------------------------
def _make_kernel(num_heads, head_dim, eps=1e-5):

    def kernel(x_ref, qh_ref,
               lnkv_g_ref, lnkv_b_ref,
               wk_ref, bk_ref, wv_ref, bv_ref,
               wo_ref, bo_ref,
               lnf_g_ref, lnf_b_ref,
               ffn_w1_ref, ffn_w2_ref,
               out_ref,
               m_ref, l_ref, acc_ref):
        s_idx = pl.program_id(1)
        n_s = pl.num_programs(1)

        # ---- init online-softmax state at the first S tile of this batch row ----
        @pl.when(s_idx == 0)
        def _():
            m_ref[...] = jnp.full_like(m_ref, -jnp.inf)
            l_ref[...] = jnp.zeros_like(l_ref)
            acc_ref[...] = jnp.zeros_like(acc_ref)

        # ln_kv on this S tile (f32 math), bf16 operands for the MXU.
        x = x_ref[0].astype(jnp.float32)                                  # (St, KV)
        xn = _layernorm(x, lnkv_g_ref[...], lnkv_b_ref[...], eps)
        xn_b = xn.astype(jnp.bfloat16)

        for h in range(num_heads):
            # fused (k_proj @ mha_k_in) / (v_proj @ mha_v_in) per-head projections
            k_h = jnp.dot(xn_b, wk_ref[h],
                          preferred_element_type=jnp.float32) + bk_ref[h]  # (St, hd)
            v_h = jnp.dot(xn_b, wv_ref[h],
                          preferred_element_type=jnp.float32) + bv_ref[h]  # (St, hd)

            # q is pre-projected, pre-scaled and batch-invariant (wrapper-side)
            q_h = qh_ref[h]                                                # (Q, hd) bf16
            scores = jax.lax.dot_general(                                  # (Q, St)
                q_h, k_h.astype(jnp.bfloat16),
                dimension_numbers=(((1,), (1,)), ((), ())),
                preferred_element_type=jnp.float32)
            # TODO(synk): attn_mask would be added to `scores` here.

            # flash-style online softmax accumulation across S tiles
            m_prev = m_ref[h]                                              # (Q, 1)
            m_cur = jnp.maximum(m_prev, jnp.max(scores, axis=-1, keepdims=True))
            alpha = jnp.exp(m_prev - m_cur)
            p = jnp.exp(scores - m_cur)
            l_ref[h] = alpha * l_ref[h] + jnp.sum(p, axis=-1, keepdims=True)
            acc_ref[h] = alpha * acc_ref[h] + jnp.dot(
                p.astype(jnp.bfloat16), v_h.astype(jnp.bfloat16),
                preferred_element_type=jnp.float32)
            m_ref[h] = m_cur

        # ---- finalize on the last S tile: out_proj∘linear, ln_ffn, FFN ----
        @pl.when(s_idx == n_s - 1)
        def _():
            attn = bo_ref[...]                                             # (1, E) f32
            for h in range(num_heads):
                o_h = acc_ref[h] * pl.reciprocal(l_ref[h], approx=True)    # (Q, hd)
                attn = attn + jnp.dot(o_h.astype(jnp.bfloat16), wo_ref[h],
                                      preferred_element_type=jnp.float32)  # (Q, E)
            hcur = _layernorm(attn, lnf_g_ref[...], lnf_b_ref[...], eps)
            hcur = _gelu_new(jnp.dot(hcur.astype(jnp.bfloat16), ffn_w1_ref[...],
                                     preferred_element_type=jnp.float32))
            out_ref[0] = jnp.dot(hcur.astype(jnp.bfloat16), ffn_w2_ref[...],
                                 preferred_element_type=jnp.float32).astype(out_ref.dtype)

    return kernel


# --------------------------------- the wrapper ---------------------------------
def _pick_s_tile(S, max_tile=1024):
    """Largest divisor of S that is <= max_tile (prefer multiples of 16 for bf16)."""
    if S <= max_tile:
        return S
    divisors = [d for d in range(1, max_tile + 1) if S % d == 0]
    mult16 = [d for d in divisors if d % 16 == 0]
    return max(mult16) if mult16 else max(divisors)


def aria_projector(x, params, query_num, num_heads, s_tile=None):
    """Pallas forward of AriaProjector.  x: (B, S, KV) float32 (cast to bf16 inside)."""
    B, S, KV = x.shape
    f32, bf16 = jnp.float32, jnp.bfloat16

    queries = params["query"][:query_num].astype(f32)      # (Q, E)
    Q, E = queries.shape
    H = num_heads
    hd = E // H
    assert H * hd == E
    F = params["ffn_w1"].shape[1]
    O = params["ffn_w2"].shape[1]
    scale = 1.0 / math.sqrt(hd)

    # ---------------- offline weight fusion (f32 host-side, then bf16) ----------------
    wq_f = params["wq"] @ params["mwq"]                     # (E, E)
    wk_f = params["wk"] @ params["mwk"]                     # (KV, E)
    wv_f = params["wv"] @ params["mwv"]                     # (KV, E)
    wo_f = params["mwo"] @ params["lin_w"]                  # (E, E)
    bo_f = (params["mbo"] @ params["lin_w"] + params["lin_b"]).astype(f32)   # (1, E)

    # batch-invariant query path hoisted out of the kernel (bias + 1/sqrt(hd) folded in)
    nq = _layernorm(queries, params["lnq_g"], params["lnq_b"])
    q2 = (nq @ wq_f + params["mbq"]) * scale                # (Q, E)
    q_heads = q2.reshape(Q, H, hd).transpose(1, 0, 2).astype(bf16)           # (H, Q, hd)

    wk_h = wk_f.reshape(KV, H, hd).transpose(1, 0, 2).astype(bf16)           # (H, KV, hd)
    wv_h = wv_f.reshape(KV, H, hd).transpose(1, 0, 2).astype(bf16)           # (H, KV, hd)
    bk_h = params["mbk"].reshape(H, 1, hd).astype(f32)                       # (H, 1, hd)
    bv_h = params["mbv"].reshape(H, 1, hd).astype(f32)                       # (H, 1, hd)
    wo_h = wo_f.reshape(H, hd, E).astype(bf16)                               # (H, hd, E)

    lnkv_g = params["lnkv_g"].astype(f32)
    lnkv_b = params["lnkv_b"].astype(f32)
    lnf_g = params["lnf_g"].astype(f32)
    lnf_b = params["lnf_b"].astype(f32)
    ffn_w1 = params["ffn_w1"].astype(bf16)                                   # (E, F)
    ffn_w2 = params["ffn_w2"].astype(bf16)                                   # (F, O)

    x_bf = x.astype(bf16)

    # ---------------- grid / block specs ----------------
    if s_tile is None:
        s_tile = _pick_s_tile(S)
    assert S % s_tile == 0
    n_s = S // s_tile

    operands = [x_bf, q_heads,
                lnkv_g, lnkv_b,
                wk_h, bk_h, wv_h, bv_h,
                wo_h, bo_f,
                lnf_g, lnf_b,
                ffn_w1, ffn_w2]

    def _const_spec(arr):
        zeros = (0,) * arr.ndim
        return pl.BlockSpec(arr.shape, lambda b, s, _z=zeros: _z)

    in_specs = [pl.BlockSpec((1, s_tile, KV), lambda b, s: (b, s, 0))]
    in_specs += [_const_spec(op) for op in operands[1:]]

    out_spec = pl.BlockSpec((1, Q, O), lambda b, s: (b, 0, 0))

    grid_spec = pltpu.PrefetchScalarGridSpec(
        num_scalar_prefetch=0,
        grid=(B, n_s),
        in_specs=in_specs,
        out_specs=out_spec,
        scratch_shapes=[
            pltpu.VMEM((H, Q, 1), f32),    # m  (running max)
            pltpu.VMEM((H, Q, 1), f32),    # l  (running denom)
            pltpu.VMEM((H, Q, hd), f32),   # acc (running P·V)
        ],
    )

    return pl.pallas_call(
        _make_kernel(H, hd),
        out_shape=jax.ShapeDtypeStruct((B, Q, O), f32),
        grid_spec=grid_spec,
        compiler_params=pltpu.CompilerParams(
            dimension_semantics=("parallel", "arbitrary"),
            vmem_limit_bytes=48 * 1024 * 1024,
        ),
    )(*operands)


# ----------------------- pure-JAX reference (original unfused math) -----------------------
def _reference_single(x, params, query_num, num_heads):
    q_in = params["query"][:query_num]
    E = q_in.shape[-1]
    hd = E // num_heads
    scale = 1.0 / math.sqrt(hd)

    nq = _layernorm(q_in, params["lnq_g"], params["lnq_b"])
    query = nq @ params["wq"]
    xn = _layernorm(x, params["lnkv_g"], params["lnkv_b"])
    key = xn @ params["wk"]
    value = xn @ params["wv"]
    q2 = query @ params["mwq"] + params["mbq"]
    k2 = key @ params["mwk"] + params["mbk"]
    v2 = value @ params["mwv"] + params["mbv"]

    outs = []
    for h in range(num_heads):
        sl = slice(h * hd, (h + 1) * hd)
        scores = (q2[:, sl] @ k2[:, sl].T) * scale
        p = jax.nn.softmax(scores, axis=-1)
        outs.append(p @ v2[:, sl])
    attn = jnp.concatenate(outs, axis=-1)
    attn = attn @ params["mwo"] + params["mbo"]
    attn = attn @ params["lin_w"] + params["lin_b"]
    h_ = _layernorm(attn, params["lnf_g"], params["lnf_b"])
    h_ = _gelu_new(h_ @ params["ffn_w1"])
    return h_ @ params["ffn_w2"]


def reference(x, params, query_num, num_heads):
    return jax.vmap(lambda xb: _reference_single(xb, params, query_num, num_heads))(x)


# -------------------------------------------- main --------------------------------------------
if __name__ == "__main__":
    # small but representative shapes
    B, S, KV, E, H, F, O = 2, 16, 32, 32, 4, 64, 32
    patch_to_query_dict = {S: 8}
    query_num = patch_to_query_dict[S]
    MAXQ = max(patch_to_query_dict.values())

    key = jax.random.PRNGKey(0)
    ks = jax.random.split(key, 16)
    std = 0.02

    params = {
        # learned queries (trunc_normal std=0.02 in torch; plain normal here, deterministic)
        "query":  std * jax.random.normal(ks[0], (MAXQ, E), jnp.float32),
        # cross_attn.layer_norm / ln_kv
        "lnq_g":  jnp.ones((1, E), jnp.float32),  "lnq_b":  jnp.zeros((1, E), jnp.float32),
        "lnkv_g": jnp.ones((1, KV), jnp.float32), "lnkv_b": jnp.zeros((1, KV), jnp.float32),
        # cross_attn q/k/v projections (bias-free), pre-transposed to (in, out)
        "wq": std * jax.random.normal(ks[1], (E, E), jnp.float32),
        "wk": std * jax.random.normal(ks[2], (KV, E), jnp.float32),
        "wv": std * jax.random.normal(ks[3], (KV, E), jnp.float32),
        # nn.MultiheadAttention in_proj (split into q/k/v) + out_proj, all with bias
        "mwq": std * jax.random.normal(ks[4], (E, E), jnp.float32),
        "mwk": std * jax.random.normal(ks[5], (E, E), jnp.float32),
        "mwv": std * jax.random.normal(ks[6], (E, E), jnp.float32),
        "mbq": jnp.zeros((1, E), jnp.float32),
        "mbk": jnp.zeros((1, E), jnp.float32),
        "mbv": jnp.zeros((1, E), jnp.float32),
        "mwo": std * jax.random.normal(ks[7], (E, E), jnp.float32),
        "mbo": jnp.zeros((1, E), jnp.float32),
        # cross_attn.linear
        "lin_w": std * jax.random.normal(ks[8], (E, E), jnp.float32),
        "lin_b": jnp.zeros((1, E), jnp.float32),
        # ln_ffn + FFN
        "lnf_g": jnp.ones((1, E), jnp.float32), "lnf_b": jnp.zeros((1, E), jnp.float32),
        "ffn_w1": std * jax.random.normal(ks[9], (E, F), jnp.float32),
        "ffn_w2": std * jax.random.normal(ks[10], (F, O), jnp.float32),
    }

    x = jax.random.normal(ks[11], (B, S, KV), jnp.float32)

    out = aria_projector(x, params, query_num, H)
    out = jax.block_until_ready(out)

    assert out.shape == (B, query_num, O), out.shape
    ref = reference(x, params, query_num, H)
    # bf16 weight/activation storage + weight fusion -> slightly looser tolerance than pure f32
    np.testing.assert_allclose(np.asarray(out), np.asarray(ref), rtol=2e-2, atol=2e-3)

    print("KERNEL_OK")
</pallas_src>

<mosaic_0001>
module attributes {stable_mosaic.version = 11 : i64} {
  func.func @kernel(%arg0: i32, %arg1: i32, %arg2: memref<1x16x32xbf16, #tpu.memory_space<vmem>>, %arg3: memref<4x8x8xbf16, #tpu.memory_space<vmem>>, %arg4: memref<1x32xf32, #tpu.memory_space<vmem>>, %arg5: memref<1x32xf32, #tpu.memory_space<vmem>>, %arg6: memref<4x32x8xbf16, #tpu.memory_space<vmem>>, %arg7: memref<4x1x8xf32, #tpu.memory_space<vmem>>, %arg8: memref<4x32x8xbf16, #tpu.memory_space<vmem>>, %arg9: memref<4x1x8xf32, #tpu.memory_space<vmem>>, %arg10: memref<4x8x32xbf16, #tpu.memory_space<vmem>>, %arg11: memref<1x32xf32, #tpu.memory_space<vmem>>, %arg12: memref<1x32xf32, #tpu.memory_space<vmem>>, %arg13: memref<1x32xf32, #tpu.memory_space<vmem>>, %arg14: memref<32x64xbf16, #tpu.memory_space<vmem>>, %arg15: memref<64x32xbf16, #tpu.memory_space<vmem>>, %arg16: memref<1x8x32xf32, #tpu.memory_space<vmem>>, %arg17: memref<4x8x1xf32, #tpu.memory_space<vmem>>, %arg18: memref<4x8x1xf32, #tpu.memory_space<vmem>>, %arg19: memref<4x8x8xf32, #tpu.memory_space<vmem>>) attributes {dimension_semantics = [#tpu.dimension_semantics<parallel>, #tpu.dimension_semantics<arbitrary>], iteration_bounds = array<i64: 2, 1>, scalar_prefetch = 0 : i64, scratch_operands = 3 : i64, tpu.core_type = #tpu.core_type<tc>, window_params = [{transform_indices = @transform_0, window_bounds = array<i64: 1, 16, 32>}, {pipeline_mode = #tpu.pipeline_mode<synchronous>, transform_indices = @transform_1, window_bounds = array<i64: 4, 8, 8>}, {pipeline_mode = #tpu.pipeline_mode<synchronous>, transform_indices = @transform_2, window_bounds = array<i64: 1, 32>}, {pipeline_mode = #tpu.pipeline_mode<synchronous>, transform_indices = @transform_3, window_bounds = array<i64: 1, 32>}, {pipeline_mode = #tpu.pipeline_mode<synchronous>, transform_indices = @transform_4, window_bounds = array<i64: 4, 32, 8>}, {pipeline_mode = #tpu.pipeline_mode<synchronous>, transform_indices = @transform_5, window_bounds = array<i64: 4, 1, 8>}, {pipeline_mode = #tpu.pipeline_mode<synchronous>, transform_indices = @transform_6, window_bounds = array<i64: 4, 32, 8>}, {pipeline_mode = #tpu.pipeline_mode<synchronous>, transform_indices = @transform_7, window_bounds = array<i64: 4, 1, 8>}, {pipeline_mode = #tpu.pipeline_mode<synchronous>, transform_indices = @transform_8, window_bounds = array<i64: 4, 8, 32>}, {pipeline_mode = #tpu.pipeline_mode<synchronous>, transform_indices = @transform_9, window_bounds = array<i64: 1, 32>}, {pipeline_mode = #tpu.pipeline_mode<synchronous>, transform_indices = @transform_10, window_bounds = array<i64: 1, 32>}, {pipeline_mode = #tpu.pipeline_mode<synchronous>, transform_indices = @transform_11, window_bounds = array<i64: 1, 32>}, {pipeline_mode = #tpu.pipeline_mode<synchronous>, transform_indices = @transform_12, window_bounds = array<i64: 32, 64>}, {pipeline_mode = #tpu.pipeline_mode<synchronous>, transform_indices = @transform_13, window_bounds = array<i64: 64, 32>}, {transform_indices = @transform_14, window_bounds = array<i64: 1, 8, 32>}]} {
    %c0_i32 = arith.constant 0 : i32
    %0 = arith.cmpi eq, %arg1, %c0_i32 : i32
    %1 = arith.extui %0 : i1 to i32
    %c0_i32_0 = arith.constant 0 : i32
    %2 = arith.cmpi ne, %1, %c0_i32_0 : i32
    scf.if %2 {
      %cst_166 = arith.constant 0xFF800000 : f32
      %238 = vector.broadcast %cst_166 : f32 to vector<4x8x1xf32>
      %c0_167 = arith.constant 0 : index
      %c0_168 = arith.constant 0 : index
      %c0_169 = arith.constant 0 : index
      %239 = vector.load %arg17[%c0_167, %c0_168, %c0_169] : memref<4x8x1xf32, #tpu.memory_space<vmem>>, vector<4x8x1xf32>
      tpu.vector_store %arg17[%c0_167, %c0_168, %c0_169], %238 {strides = array<i32>} : memref<4x8x1xf32, #tpu.memory_space<vmem>>, vector<4x8x1xf32>,
      %cst_170 = arith.constant 0.000000e+00 : f32
      %240 = vector.broadcast %cst_170 : f32 to vector<4x8x1xf32>
      %c0_171 = arith.constant 0 : index
      %c0_172 = arith.constant 0 : index
      %c0_173 = arith.constant 0 : index
      %241 = vector.load %arg18[%c0_171, %c0_172, %c0_173] : memref<4x8x1xf32, #tpu.memory_space<vmem>>, vector<4x8x1xf32>
      tpu.vector_store %arg18[%c0_171, %c0_172, %c0_173], %240 {strides = array<i32>} : memref<4x8x1xf32, #tpu.memory_space<vmem>>, vector<4x8x1xf32>,
      %cst_174 = arith.constant 0.000000e+00 : f32
      %242 = vector.broadcast %cst_174 : f32 to vector<4x8x8xf32>
      %c0_175 = arith.constant 0 : index
      %c0_176 = arith.constant 0 : index
      %c0_177 = arith.constant 0 : index
      %243 = vector.load %arg19[%c0_175, %c0_176, %c0_177] : memref<4x8x8xf32, #tpu.memory_space<vmem>>, vector<4x8x8xf32>
      tpu.vector_store %arg19[%c0_175, %c0_176, %c0_177], %242 {strides = array<i32>} : memref<4x8x8xf32, #tpu.memory_space<vmem>>, vector<4x8x8xf32>,
    } else {
    }
    %c0 = arith.constant 0 : index
    %c0_1 = arith.constant 0 : index
    %c0_2 = arith.constant 0 : index
    %3 = vector.load %arg2[%c0, %c0_1, %c0_2] : memref<1x16x32xbf16, #tpu.memory_space<vmem>>, vector<1x16x32xbf16>
    %4 = vector.shape_cast %3 : vector<1x16x32xbf16> to vector<16x32xbf16>
    %5 = arith.extf %4 : vector<16x32xbf16> to vector<16x32xf32>
    %c0_3 = arith.constant 0 : index
    %c0_4 = arith.constant 0 : index
    %6 = vector.load %arg4[%c0_3, %c0_4] : memref<1x32xf32, #tpu.memory_space<vmem>>, vector<1x32xf32>
    %c0_5 = arith.constant 0 : index
    %c0_6 = arith.constant 0 : index
    %7 = vector.load %arg5[%c0_5, %c0_6] : memref<1x32xf32, #tpu.memory_space<vmem>>, vector<1x32xf32>
    %cst = arith.constant dense<0.000000e+00> : vector<16xf32>
    %8 = vector.multi_reduction <add>, %5, %cst [1] : vector<16x32xf32> to vector<16xf32>
    %9 = vector.shape_cast %8 : vector<16xf32> to vector<16x1xf32>
    %cst_7 = arith.constant 3.200000e+01 : f32
    %10 = vector.broadcast %cst_7 : f32 to vector<16x1xf32>
    %11 = arith.divf %9, %10 : vector<16x1xf32>
    %12 = vector.broadcast %11 : vector<16x1xf32> to vector<16x32xf32>
    %13 = arith.subf %5, %12 : vector<16x32xf32>
    %14 = arith.mulf %13, %13 : vector<16x32xf32>
    %cst_8 = arith.constant dense<0.000000e+00> : vector<16xf32>
    %15 = vector.multi_reduction <add>, %14, %cst_8 [1] : vector<16x32xf32> to vector<16xf32>
    %16 = vector.shape_cast %15 : vector<16xf32> to vector<16x1xf32>
    %cst_9 = arith.constant 3.200000e+01 : f32
    %17 = vector.broadcast %cst_9 : f32 to vector<16x1xf32>
    %18 = arith.divf %16, %17 : vector<16x1xf32>
    %19 = vector.broadcast %11 : vector<16x1xf32> to vector<16x32xf32>
    %20 = arith.subf %5, %19 : vector<16x32xf32>
    %cst_10 = arith.constant 9.99999974E-6 : f32
    %21 = vector.broadcast %cst_10 : f32 to vector<16x1xf32>
    %22 = arith.addf %18, %21 : vector<16x1xf32>
    %23 = math.rsqrt %22 : vector<16x1xf32>
    %24 = vector.broadcast %23 : vector<16x1xf32> to vector<16x32xf32>
    %25 = arith.mulf %20, %24 : vector<16x32xf32>
    %26 = vector.broadcast %6 : vector<1x32xf32> to vector<16x32xf32>
    %27 = arith.mulf %25, %26 : vector<16x32xf32>
    %28 = vector.broadcast %7 : vector<1x32xf32> to vector<16x32xf32>
    %29 = arith.addf %27, %28 : vector<16x32xf32>
    %30 = arith.truncf %29 : vector<16x32xf32> to vector<16x32xbf16>
    %c0_11 = arith.constant 0 : index
    %c0_12 = arith.constant 0 : index
    %c0_13 = arith.constant 0 : index
    %31 = vector.load %arg6[%c0_11, %c0_12, %c0_13] : memref<4x32x8xbf16, #tpu.memory_space<vmem>>, vector<1x32x8xbf16>
    %32 = vector.shape_cast %31 : vector<1x32x8xbf16> to vector<32x8xbf16>
    %cst_14 = arith.constant dense<0.000000e+00> : vector<16x8xf32>
    %33 = tpu.matmul %30, %32, %cst_14 {dimension_numbers = #tpu.dot_dimension_numbers<[1], [0], [0], [1], [0, 0, 1, 1], [], []>} : vector<16x32xbf16>, vector<32x8xbf16>, vector<16x8xf32> -> vector<16x8xf32>
    %c0_15 = arith.constant 0 : index
    %c0_16 = arith.constant 0 : index
    %c0_17 = arith.constant 0 : index
    %34 = vector.load %arg7[%c0_15, %c0_16, %c0_17] : memref<4x1x8xf32, #tpu.memory_space<vmem>>, vector<1x1x8xf32>
    %35 = vector.shape_cast %34 : vector<1x1x8xf32> to vector<1x8xf32>
    %36 = vector.broadcast %35 : vector<1x8xf32> to vector<16x8xf32>
    %37 = arith.addf %33, %36 : vector<16x8xf32>
    %c0_18 = arith.constant 0 : index
    %c0_19 = arith.constant 0 : index
    %c0_20 = arith.constant 0 : index
    %38 = vector.load %arg8[%c0_18, %c0_19, %c0_20] : memref<4x32x8xbf16, #tpu.memory_space<vmem>>, vector<1x32x8xbf16>
    %39 = vector.shape_cast %38 : vector<1x32x8xbf16> to vector<32x8xbf16>
    %cst_21 = arith.constant dense<0.000000e+00> : vector<16x8xf32>
    %40 = tpu.matmul %30, %39, %cst_21 {dimension_numbers = #tpu.dot_dimension_numbers<[1], [0], [0], [1], [0, 0, 1, 1], [], []>} : vector<16x32xbf16>, vector<32x8xbf16>, vector<16x8xf32> -> vector<16x8xf32>
    %c0_22 = arith.constant 0 : index
    %c0_23 = arith.constant 0 : index
    %c0_24 = arith.constant 0 : index
    %41 = vector.load %arg9[%c0_22, %c0_23, %c0_24] : memref<4x1x8xf32, #tpu.memory_space<vmem>>, vector<1x1x8xf32>
    %42 = vector.shape_cast %41 : vector<1x1x8xf32> to vector<1x8xf32>
    %43 = vector.broadcast %42 : vector<1x8xf32> to vector<16x8xf32>
    %44 = arith.addf %40, %43 : vector<16x8xf32>
    %c0_25 = arith.constant 0 : index
    %c0_26 = arith.constant 0 : index
    %c0_27 = arith.constant 0 : index
    %45 = vector.load %arg3[%c0_25, %c0_26, %c0_27] : memref<4x8x8xbf16, #tpu.memory_space<vmem>>, vector<1x8x8xbf16>
    %46 = vector.shape_cast %45 : vector<1x8x8xbf16> to vector<8x8xbf16>
    %47 = arith.truncf %37 : vector<16x8xf32> to vector<16x8xbf16>
    %cst_28 = arith.constant dense<0.000000e+00> : vector<8x16xf32>
    %48 = tpu.matmul %46, %47, %cst_28 {dimension_numbers = #tpu.dot_dimension_numbers<[1], [1], [0], [0], [0, 0, 1, 0], [], []>} : vector<8x8xbf16>, vector<16x8xbf16>, vector<8x16xf32> -> vector<8x16xf32>
    %c0_29 = arith.constant 0 : index
    %c0_30 = arith.constant 0 : index
    %c0_31 = arith.constant 0 : index
    %49 = vector.load %arg17[%c0_29, %c0_30, %c0_31] : memref<4x8x1xf32, #tpu.memory_space<vmem>>, vector<1x8x1xf32>
    %50 = vector.shape_cast %49 : vector<1x8x1xf32> to vector<8x1xf32>
    %cst_32 = arith.constant dense<0xFF800000> : vector<8xf32>
    %51 = vector.multi_reduction <maximumf>, %48, %cst_32 [1] : vector<8x16xf32> to vector<8xf32>
    %52 = vector.shape_cast %51 : vector<8xf32> to vector<8x1xf32>
    %53 = arith.maximumf %50, %52 : vector<8x1xf32>
    %54 = arith.subf %50, %53 : vector<8x1xf32>
    %55 = math.exp %54 : vector<8x1xf32>
    %56 = vector.broadcast %53 : vector<8x1xf32> to vector<8x16xf32>
    %57 = arith.subf %48, %56 : vector<8x16xf32>
    %58 = math.exp %57 : vector<8x16xf32>
    %c0_33 = arith.constant 0 : index
    %c0_34 = arith.constant 0 : index
    %c0_35 = arith.constant 0 : index
    %59 = vector.load %arg18[%c0_33, %c0_34, %c0_35] : memref<4x8x1xf32, #tpu.memory_space<vmem>>, vector<1x8x1xf32>
    %60 = vector.shape_cast %59 : vector<1x8x1xf32> to vector<8x1xf32>
    %61 = arith.mulf %55, %60 : vector<8x1xf32>
    %cst_36 = arith.constant dense<0.000000e+00> : vector<8xf32>
    %62 = vector.multi_reduction <add>, %58, %cst_36 [1] : vector<8x16xf32> to vector<8xf32>
    %63 = vector.shape_cast %62 : vector<8xf32> to vector<8x1xf32>
    %64 = arith.addf %61, %63 : vector<8x1xf32>
    %c0_37 = arith.constant 0 : index
    %c0_38 = arith.constant 0 : index
    %c0_39 = arith.constant 0 : index
    %65 = vector.load %arg18[%c0_37, %c0_38, %c0_39] : memref<4x8x1xf32, #tpu.memory_space<vmem>>, vector<1x8x1xf32>
    %66 = vector.shape_cast %65 : vector<1x8x1xf32> to vector<8x1xf32>
    %67 = vector.shape_cast %64 : vector<8x1xf32> to vector<1x8x1xf32>
    tpu.vector_store %arg18[%c0_37, %c0_38, %c0_39], %67 {strides = array<i32>} : memref<4x8x1xf32, #tpu.memory_space<vmem>>, vector<1x8x1xf32>,
    %c0_40 = arith.constant 0 : index
    %c0_41 = arith.constant 0 : index
    %c0_42 = arith.constant 0 : index
    %68 = vector.load %arg19[%c0_40, %c0_41, %c0_42] : memref<4x8x8xf32, #tpu.memory_space<vmem>>, vector<1x8x8xf32>
    %69 = vector.shape_cast %68 : vector<1x8x8xf32> to vector<8x8xf32>
    %70 = vector.broadcast %55 : vector<8x1xf32> to vector<8x8xf32>
    %71 = arith.mulf %70, %69 : vector<8x8xf32>
    %72 = arith.truncf %58 : vector<8x16xf32> to vector<8x16xbf16>
    %73 = arith.truncf %44 : vector<16x8xf32> to vector<16x8xbf16>
    %cst_43 = arith.constant dense<0.000000e+00> : vector<8x8xf32>
    %74 = tpu.matmul %72, %73, %cst_43 {dimension_numbers = #tpu.dot_dimension_numbers<[1], [0], [0], [1], [0, 0, 1, 1], [], []>} : vector<8x16xbf16>, vector<16x8xbf16>, vector<8x8xf32> -> vector<8x8xf32>
    %75 = arith.addf %71, %74 : vector<8x8xf32>
    %c0_44 = arith.constant 0 : index
    %c0_45 = arith.constant 0 : index
    %c0_46 = arith.constant 0 : index
    %76 = vector.load %arg19[%c0_44, %c0_45, %c0_46] : memref<4x8x8xf32, #tpu.memory_space<vmem>>, vector<1x8x8xf32>
    %77 = vector.shape_cast %76 : vector<1x8x8xf32> to vector<8x8xf32>
    %78 = vector.shape_cast %75 : vector<8x8xf32> to vector<1x8x8xf32>
    tpu.vector_store %arg19[%c0_44, %c0_45, %c0_46], %78 {strides = array<i32>} : memref<4x8x8xf32, #tpu.memory_space<vmem>>, vector<1x8x8xf32>,
    %c0_47 = arith.constant 0 : index
    %c0_48 = arith.constant 0 : index
    %c0_49 = arith.constant 0 : index
    %79 = vector.load %arg17[%c0_47, %c0_48, %c0_49] : memref<4x8x1xf32, #tpu.memory_space<vmem>>, vector<1x8x1xf32>
    %80 = vector.shape_cast %79 : vector<1x8x1xf32> to vector<8x1xf32>
    %81 = vector.shape_cast %53 : vector<8x1xf32> to vector<1x8x1xf32>
    tpu.vector_store %arg17[%c0_47, %c0_48, %c0_49], %81 {strides = array<i32>} : memref<4x8x1xf32, #tpu.memory_space<vmem>>, vector<1x8x1xf32>,
    %c1 = arith.constant 1 : index
    %c0_50 = arith.constant 0 : index
    %c0_51 = arith.constant 0 : index
    %82 = vector.load %arg6[%c1, %c0_50, %c0_51] : memref<4x32x8xbf16, #tpu.memory_space<vmem>>, vector<1x32x8xbf16>
    %83 = vector.shape_cast %82 : vector<1x32x8xbf16> to vector<32x8xbf16>
    %cst_52 = arith.constant dense<0.000000e+00> : vector<16x8xf32>
    %84 = tpu.matmul %30, %83, %cst_52 {dimension_numbers = #tpu.dot_dimension_numbers<[1], [0], [0], [1], [0, 0, 1, 1], [], []>} : vector<16x32xbf16>, vector<32x8xbf16>, vector<16x8xf32> -> vector<16x8xf32>
    %c1_53 = arith.constant 1 : index
    %c0_54 = arith.constant 0 : index
    %c0_55 = arith.constant 0 : index
    %85 = vector.load %arg7[%c1_53, %c0_54, %c0_55] : memref<4x1x8xf32, #tpu.memory_space<vmem>>, vector<1x1x8xf32>
    %86 = vector.shape_cast %85 : vector<1x1x8xf32> to vector<1x8xf32>
    %87 = vector.broadcast %86 : vector<1x8xf32> to vector<16x8xf32>
    %88 = arith.addf %84, %87 : vector<16x8xf32>
    %c1_56 = arith.constant 1 : index
    %c0_57 = arith.constant 0 : index
    %c0_58 = arith.constant 0 : index
    %89 = vector.load %arg8[%c1_56, %c0_57, %c0_58] : memref<4x32x8xbf16, #tpu.memory_space<vmem>>, vector<1x32x8xbf16>
    %90 = vector.shape_cast %89 : vector<1x32x8xbf16> to vector<32x8xbf16>
    %cst_59 = arith.constant dense<0.000000e+00> : vector<16x8xf32>
    %91 = tpu.matmul %30, %90, %cst_59 {dimension_numbers = #tpu.dot_dimension_numbers<[1], [0], [0], [1], [0, 0, 1, 1], [], []>} : vector<16x32xbf16>, vector<32x8xbf16>, vector<16x8xf32> -> vector<16x8xf32>
    %c1_60 = arith.constant 1 : index
    %c0_61 = arith.constant 0 : index
    %c0_62 = arith.constant 0 : index
    %92 = vector.load %arg9[%c1_60, %c0_61, %c0_62] : memref<4x1x8xf32, #tpu.memory_space<vmem>>, vector<1x1x8xf32>
    %93 = vector.shape_cast %92 : vector<1x1x8xf32> to vector<1x8xf32>
    %94 = vector.broadcast %93 : vector<1x8xf32> to vector<16x8xf32>
    %95 = arith.addf %91, %94 : vector<16x8xf32>
    %c1_63 = arith.constant 1 : index
    %c0_64 = arith.constant 0 : index
    %c0_65 = arith.constant 0 : index
    %96 = vector.load %arg3[%c1_63, %c0_64, %c0_65] : memref<4x8x8xbf16, #tpu.memory_space<vmem>>, vector<1x8x8xbf16>
    %97 = vector.shape_cast %96 : vector<1x8x8xbf16> to vector<8x8xbf16>
    %98 = arith.truncf %88 : vector<16x8xf32> to vector<16x8xbf16>
    %cst_66 = arith.constant dense<0.000000e+00> : vector<8x16xf32>
    %99 = tpu.matmul %97, %98, %cst_66 {dimension_numbers = #tpu.dot_dimension_numbers<[1], [1], [0], [0], [0, 0, 1, 0], [], []>} : vector<8x8xbf16>, vector<16x8xbf16>, vector<8x16xf32> -> vector<8x16xf32>
    %c1_67 = arith.constant 1 : index
    %c0_68 = arith.constant 0 : index
    %c0_69 = arith.constant 0 : index
    %100 = vector.load %arg17[%c1_67, %c0_68, %c0_69] : memref<4x8x1xf32, #tpu.memory_space<vmem>>, vector<1x8x1xf32>
    %101 = vector.shape_cast %100 : vector<1x8x1xf32> to vector<8x1xf32>
    %cst_70 = arith.constant dense<0xFF800000> : vector<8xf32>
    %102 = vector.multi_reduction <maximumf>, %99, %cst_70 [1] : vector<8x16xf32> to vector<8xf32>
    %103 = vector.shape_cast %102 : vector<8xf32> to vector<8x1xf32>
    %104 = arith.maximumf %101, %103 : vector<8x1xf32>
    %105 = arith.subf %101, %104 : vector<8x1xf32>
    %106 = math.exp %105 : vector<8x1xf32>
    %107 = vector.broadcast %104 : vector<8x1xf32> to vector<8x16xf32>
    %108 = arith.subf %99, %107 : vector<8x16xf32>
    %109 = math.exp %108 : vector<8x16xf32>
    %c1_71 = arith.constant 1 : index
    %c0_72 = arith.constant 0 : index
    %c0_73 = arith.constant 0 : index
    %110 = vector.load %arg18[%c1_71, %c0_72, %c0_73] : memref<4x8x1xf32, #tpu.memory_space<vmem>>, vector<1x8x1xf32>
    %111 = vector.shape_cast %110 : vector<1x8x1xf32> to vector<8x1xf32>
    %112 = arith.mulf %106, %111 : vector<8x1xf32>
    %cst_74 = arith.constant dense<0.000000e+00> : vector<8xf32>
    %113 = vector.multi_reduction <add>, %109, %cst_74 [1] : vector<8x16xf32> to vector<8xf32>
    %114 = vector.shape_cast %113 : vector<8xf32> to vector<8x1xf32>
    %115 = arith.addf %112, %114 : vector<8x1xf32>
    %c1_75 = arith.constant 1 : index
    %c0_76 = arith.constant 0 : index
    %c0_77 = arith.constant 0 : index
    %116 = vector.load %arg18[%c1_75, %c0_76, %c0_77] : memref<4x8x1xf32, #tpu.memory_space<vmem>>, vector<1x8x1xf32>
    %117 = vector.shape_cast %116 : vector<1x8x1xf32> to vector<8x1xf32>
    %118 = vector.shape_cast %115 : vector<8x1xf32> to vector<1x8x1xf32>
    tpu.vector_store %arg18[%c1_75, %c0_76, %c0_77], %118 {strides = array<i32>} : memref<4x8x1xf32, #tpu.memory_space<vmem>>, vector<1x8x1xf32>,
    %c1_78 = arith.constant 1 : index
    %c0_79 = arith.constant 0 : index
    %c0_80 = arith.constant 0 : index
    %119 = vector.load %arg19[%c1_78, %c0_79, %c0_80] : memref<4x8x8xf32, #tpu.memory_space<vmem>>, vector<1x8x8xf32>
    %120 = vector.shape_cast %119 : vector<1x8x8xf32> to vector<8x8xf32>
    %121 = vector.broadcast %106 : vector<8x1xf32> to vector<8x8xf32>
    %122 = arith.mulf %121, %120 : vector<8x8xf32>
    %123 = arith.truncf %109 : vector<8x16xf32> to vector<8x16xbf16>
    %124 = arith.truncf %95 : vector<16x8xf32> to vector<16x8xbf16>
    %cst_81 = arith.constant dense<0.000000e+00> : vector<8x8xf32>
    %125 = tpu.matmul %123, %124, %cst_81 {dimension_numbers = #tpu.dot_dimension_numbers<[1], [0], [0], [1], [0, 0, 1, 1], [], []>} : vector<8x16xbf16>, vector<16x8xbf16>, vector<8x8xf32> -> vector<8x8xf32>
    %126 = arith.addf %122, %125 : vector<8x8xf32>
    %c1_82 = arith.constant 1 : index
    %c0_83 = arith.constant 0 : index
    %c0_84 = arith.constant 0 : index
    %127 = vector.load %arg19[%c1_82, %c0_83, %c0_84] : memref<4x8x8xf32, #tpu.memory_space<vmem>>, vector<1x8x8xf32>
    %128 = vector.shape_cast %127 : vector<1x8x8xf32> to vector<8x8xf32>
    %129 = vector.shape_cast %126 : vector<8x8xf32> to vector<1x8x8xf32>
    tpu.vector_store %arg19[%c1_82, %c0_83, %c0_84], %129 {strides = array<i32>} : memref<4x8x8xf32, #tpu.memory_space<vmem>>, vector<1x8x8xf32>,
    %c1_85 = arith.constant 1 : index
    %c0_86 = arith.constant 0 : index
    %c0_87 = arith.constant 0 : index
    %130 = vector.load %arg17[%c1_85, %c0_86, %c0_87] : memref<4x8x1xf32, #tpu.memory_space<vmem>>, vector<1x8x1xf32>
    %131 = vector.shape_cast %130 : vector<1x8x1xf32> to vector<8x1xf32>
    %132 = vector.shape_cast %104 : vector<8x1xf32> to vector<1x8x1xf32>
    tpu.vector_store %arg17[%c1_85, %c0_86, %c0_87], %132 {strides = array<i32>} : memref<4x8x1xf32, #tpu.memory_space<vmem>>, vector<1x8x1xf32>,
    %c2 = arith.constant 2 : index
    %c0_88 = arith.constant 0 : index
    %c0_89 = arith.constant 0 : index
    %133 = vector.load %arg6[%c2, %c0_88, %c0_89] : memref<4x32x8xbf16, #tpu.memory_space<vmem>>, vector<1x32x8xbf16>
    %134 = vector.shape_cast %133 : vector<1x32x8xbf16> to vector<32x8xbf16>
    %cst_90 = arith.constant dense<0.000000e+00> : vector<16x8xf32>
    %135 = tpu.matmul %30, %134, %cst_90 {dimension_numbers = #tpu.dot_dimension_numbers<[1], [0], [0], [1], [0, 0, 1, 1], [], []>} : vector<16x32xbf16>, vector<32x8xbf16>, vector<16x8xf32> -> vector<16x8xf32>
    %c2_91 = arith.constant 2 : index
    %c0_92 = arith.constant 0 : index
    %c0_93 = arith.constant 0 : index
    %136 = vector.load %arg7[%c2_91, %c0_92, %c0_93] : memref<4x1x8xf32, #tpu.memory_space<vmem>>, vector<1x1x8xf32>
    %137 = vector.shape_cast %136 : vector<1x1x8xf32> to vector<1x8xf32>
    %138 = vector.broadcast %137 : vector<1x8xf32> to vector<16x8xf32>
    %139 = arith.addf %135, %138 : vector<16x8xf32>
    %c2_94 = arith.constant 2 : index
    %c0_95 = arith.constant 0 : index
    %c0_96 = arith.constant 0 : index
    %140 = vector.load %arg8[%c2_94, %c0_95, %c0_96] : memref<4x32x8xbf16, #tpu.memory_space<vmem>>, vector<1x32x8xbf16>
    %141 = vector.shape_cast %140 : vector<1x32x8xbf16> to vector<32x8xbf16>
    %cst_97 = arith.constant dense<0.000000e+00> : vector<16x8xf32>
    %142 = tpu.matmul %30, %141, %cst_97 {dimension_numbers = #tpu.dot_dimension_numbers<[1], [0], [0], [1], [0, 0, 1, 1], [], []>} : vector<16x32xbf16>, vector<32x8xbf16>, vector<16x8xf32> -> vector<16x8xf32>
    %c2_98 = arith.constant 2 : index
    %c0_99 = arith.constant 0 : index
    %c0_100 = arith.constant 0 : index
    %143 = vector.load %arg9[%c2_98, %c0_99, %c0_100] : memref<4x1x8xf32, #tpu.memory_space<vmem>>, vector<1x1x8xf32>
    %144 = vector.shape_cast %143 : vector<1x1x8xf32> to vector<1x8xf32>
    %145 = vector.broadcast %144 : vector<1x8xf32> to vector<16x8xf32>
    %146 = arith.addf %142, %145 : vector<16x8xf32>
    %c2_101 = arith.constant 2 : index
    %c0_102 = arith.constant 0 : index
    %c0_103 = arith.constant 0 : index
    %147 = vector.load %arg3[%c2_101, %c0_102, %c0_103] : memref<4x8x8xbf16, #tpu.memory_space<vmem>>, vector<1x8x8xbf16>
    %148 = vector.shape_cast %147 : vector<1x8x8xbf16> to vector<8x8xbf16>
    %149 = arith.truncf %139 : vector<16x8xf32> to vector<16x8xbf16>
    %cst_104 = arith.constant dense<0.000000e+00> : vector<8x16xf32>
    %150 = tpu.matmul %148, %149, %cst_104 {dimension_numbers = #tpu.dot_dimension_numbers<[1], [1], [0], [0], [0, 0, 1, 0], [], []>} : vector<8x8xbf16>, vector<16x8xbf16>, vector<8x16xf32> -> vector<8x16xf32>
    %c2_105 = arith.constant 2 : index
    %c0_106 = arith.constant 0 : index
    %c0_107 = arith.constant 0 : index
    %151 = vector.load %arg17[%c2_105, %c0_106, %c0_107] : memref<4x8x1xf32, #tpu.memory_space<vmem>>, vector<1x8x1xf32>
    %152 = vector.shape_cast %151 : vector<1x8x1xf32> to vector<8x1xf32>
    %cst_108 = arith.constant dense<0xFF800000> : vector<8xf32>
    %153 = vector.multi_reduction <maximumf>, %150, %cst_108 [1] : vector<8x16xf32> to vector<8xf32>
    %154 = vector.shape_cast %153 : vector<8xf32> to vector<8x1xf32>
    %155 = arith.maximumf %152, %154 : vector<8x1xf32>
    %156 = arith.subf %152, %155 : vector<8x1xf32>
    %157 = math.exp %156 : vector<8x1xf32>
    %158 = vector.broadcast %155 : vector<8x1xf32> to vector<8x16xf32>
    %159 = arith.subf %150, %158 : vector<8x16xf32>
    %160 = math.exp %159 : vector<8x16xf32>
    %c2_109 = arith.constant 2 : index
    %c0_110 = arith.constant 0 : index
    %c0_111 = arith.constant 0 : index
    %161 = vector.load %arg18[%c2_109, %c0_110, %c0_111] : memref<4x8x1xf32, #tpu.memory_space<vmem>>, vector<1x8x1xf32>
    %162 = vector.shape_cast %161 : vector<1x8x1xf32> to vector<8x1xf32>
    %163 = arith.mulf %157, %162 : vector<8x1xf32>
    %cst_112 = arith.constant dense<0.000000e+00> : vector<8xf32>
    %164 = vector.multi_reduction <add>, %160, %cst_112 [1] : vector<8x16xf32> to vector<8xf32>
    %165 = vector.shape_cast %164 : vector<8xf32> to vector<8x1xf32>
    %166 = arith.addf %163, %165 : vector<8x1xf32>
    %c2_113 = arith.constant 2 : index
    %c0_114 = arith.constant 0 : index
    %c0_115 = arith.constant 0 : index
    %167 = vector.load %arg18[%c2_113, %c0_114, %c0_115] : memref<4x8x1xf32, #tpu.memory_space<vmem>>, vector<1x8x1xf32>
    %168 = vector.shape_cast %167 : vector<1x8x1xf32> to vector<8x1xf32>
    %169 = vector.shape_cast %166 : vector<8x1xf32> to vector<1x8x1xf32>
    tpu.vector_store %arg18[%c2_113, %c0_114, %c0_115], %169 {strides = array<i32>} : memref<4x8x1xf32, #tpu.memory_space<vmem>>, vector<1x8x1xf32>,
    %c2_116 = arith.constant 2 : index
    %c0_117 = arith.constant 0 : index
    %c0_118 = arith.constant 0 : index
    %170 = vector.load %arg19[%c2_116, %c0_117, %c0_118] : memref<4x8x8xf32, #tpu.memory_space<vmem>>, vector<1x8x8xf32>
    %171 = vector.shape_cast %170 : vector<1x8x8xf32> to vector<8x8xf32>
    %172 = vector.broadcast %157 : vector<8x1xf32> to vector<8x8xf32>
    %173 = arith.mulf %172, %171 : vector<8x8xf32>
    %174 = arith.truncf %160 : vector<8x16xf32> to vector<8x16xbf16>
    %175 = arith.truncf %146 : vector<16x8xf32> to vector<16x8xbf16>
    %cst_119 = arith.constant dense<0.000000e+00> : vector<8x8xf32>
    %176 = tpu.matmul %174, %175, %cst_119 {dimension_numbers = #tpu.dot_dimension_numbers<[1], [0], [0], [1], [0, 0, 1, 1], [], []>} : vector<8x16xbf16>, vector<16x8xbf16>, vector<8x8xf32> -> vector<8x8xf32>
    %177 = arith.addf %173, %176 : vector<8x8xf32>
    %c2_120 = arith.constant 2 : index
    %c0_121 = arith.constant 0 : index
    %c0_122 = arith.constant 0 : index
    %178 = vector.load %arg19[%c2_120, %c0_121, %c0_122] : memref<4x8x8xf32, #tpu.memory_space<vmem>>, vector<1x8x8xf32>
    %179 = vector.shape_cast %178 : vector<1x8x8xf32> to vector<8x8xf32>
    %180 = vector.shape_cast %177 : vector<8x8xf32> to vector<1x8x8xf32>
    tpu.vector_store %arg19[%c2_120, %c0_121, %c0_122], %180 {strides = array<i32>} : memref<4x8x8xf32, #tpu.memory_space<vmem>>, vector<1x8x8xf32>,
    %c2_123 = arith.constant 2 : index
    %c0_124 = arith.constant 0 : index
    %c0_125 = arith.constant 0 : index
    %181 = vector.load %arg17[%c2_123, %c0_124, %c0_125] : memref<4x8x1xf32, #tpu.memory_space<vmem>>, vector<1x8x1xf32>
    %182 = vector.shape_cast %181 : vector<1x8x1xf32> to vector<8x1xf32>
    %183 = vector.shape_cast %155 : vector<8x1xf32> to vector<1x8x1xf32>
    tpu.vector_store %arg17[%c2_123, %c0_124, %c0_125], %183 {strides = array<i32>} : memref<4x8x1xf32, #tpu.memory_space<vmem>>, vector<1x8x1xf32>,
    %c3 = arith.constant 3 : index
    %c0_126 = arith.constant 0 : index
    %c0_127 = arith.constant 0 : index
    %184 = vector.load %arg6[%c3, %c0_126, %c0_127] : memref<4x32x8xbf16, #tpu.memory_space<vmem>>, vector<1x32x8xbf16>
    %185 = vector.shape_cast %184 : vector<1x32x8xbf16> to vector<32x8xbf16>
    %cst_128 = arith.constant dense<0.000000e+00> : vector<16x8xf32>
    %186 = tpu.matmul %30, %185, %cst_128 {dimension_numbers = #tpu.dot_dimension_numbers<[1], [0], [0], [1], [0, 0, 1, 1], [], []>} : vector<16x32xbf16>, vector<32x8xbf16>, vector<16x8xf32> -> vector<16x8xf32>
    %c3_129 = arith.constant 3 : index
    %c0_130 = arith.constant 0 : index
    %c0_131 = arith.constant 0 : index
    %187 = vector.load %arg7[%c3_129, %c0_130, %c0_131] : memref<4x1x8xf32, #tpu.memory_space<vmem>>, vector<1x1x8xf32>
    %188 = vector.shape_cast %187 : vector<1x1x8xf32> to vector<1x8xf32>
    %189 = vector.broadcast %188 : vector<1x8xf32> to vector<16x8xf32>
    %190 = arith.addf %186, %189 : vector<16x8xf32>
    %c3_132 = arith.constant 3 : index
    %c0_133 = arith.constant 0 : index
    %c0_134 = arith.constant 0 : index
    %191 = vector.load %arg8[%c3_132, %c0_133, %c0_134] : memref<4x32x8xbf16, #tpu.memory_space<vmem>>, vector<1x32x8xbf16>
    %192 = vector.shape_cast %191 : vector<1x32x8xbf16> to vector<32x8xbf16>
    %cst_135 = arith.constant dense<0.000000e+00> : vector<16x8xf32>
    %193 = tpu.matmul %30, %192, %cst_135 {dimension_numbers = #tpu.dot_dimension_numbers<[1], [0], [0], [1], [0, 0, 1, 1], [], []>} : vector<16x32xbf16>, vector<32x8xbf16>, vector<16x8xf32> -> vector<16x8xf32>
    %c3_136 = arith.constant 3 : index
    %c0_137 = arith.constant 0 : index
    %c0_138 = arith.constant 0 : index
    %194 = vector.load %arg9[%c3_136, %c0_137, %c0_138] : memref<4x1x8xf32, #tpu.memory_space<vmem>>, vector<1x1x8xf32>
    %195 = vector.shape_cast %194 : vector<1x1x8xf32> to vector<1x8xf32>
    %196 = vector.broadcast %195 : vector<1x8xf32> to vector<16x8xf32>
    %197 = arith.addf %193, %196 : vector<16x8xf32>
    %c3_139 = arith.constant 3 : index
    %c0_140 = arith.constant 0 : index
    %c0_141 = arith.constant 0 : index
    %198 = vector.load %arg3[%c3_139, %c0_140, %c0_141] : memref<4x8x8xbf16, #tpu.memory_space<vmem>>, vector<1x8x8xbf16>
    %199 = vector.shape_cast %198 : vector<1x8x8xbf16> to vector<8x8xbf16>
    %200 = arith.truncf %190 : vector<16x8xf32> to vector<16x8xbf16>
    %cst_142 = arith.constant dense<0.000000e+00> : vector<8x16xf32>
    %201 = tpu.matmul %199, %200, %cst_142 {dimension_numbers = #tpu.dot_dimension_numbers<[1], [1], [0], [0], [0, 0, 1, 0], [], []>} : vector<8x8xbf16>, vector<16x8xbf16>, vector<8x16xf32> -> vector<8x16xf32>
    %c3_143 = arith.constant 3 : index
    %c0_144 = arith.constant 0 : index
    %c0_145 = arith.constant 0 : index
    %202 = vector.load %arg17[%c3_143, %c0_144, %c0_145] : memref<4x8x1xf32, #tpu.memory_space<vmem>>, vector<1x8x1xf32>
    %203 = vector.shape_cast %202 : vector<1x8x1xf32> to vector<8x1xf32>
    %cst_146 = arith.constant dense<0xFF800000> : vector<8xf32>
    %204 = vector.multi_reduction <maximumf>, %201, %cst_146 [1] : vector<8x16xf32> to vector<8xf32>
    %205 = vector.shape_cast %204 : vector<8xf32> to vector<8x1xf32>
    %206 = arith.maximumf %203, %205 : vector<8x1xf32>
    %207 = arith.subf %203, %206 : vector<8x1xf32>
    %208 = math.exp %207 : vector<8x1xf32>
    %209 = vector.broadcast %206 : vector<8x1xf32> to vector<8x16xf32>
    %210 = arith.subf %201, %209 : vector<8x16xf32>
    %211 = math.exp %210 : vector<8x16xf32>
    %c3_147 = arith.constant 3 : index
    %c0_148 = arith.constant 0 : index
    %c0_149 = arith.constant 0 : index
    %212 = vector.load %arg18[%c3_147, %c0_148, %c0_149] : memref<4x8x1xf32, #tpu.memory_space<vmem>>, vector<1x8x1xf32>
    %213 = vector.shape_cast %212 : vector<1x8x1xf32> to vector<8x1xf32>
    %214 = arith.mulf %208, %213 : vector<8x1xf32>
    %cst_150 = arith.constant dense<0.000000e+00> : vector<8xf32>
    %215 = vector.multi_reduction <add>, %211, %cst_150 [1] : vector<8x16xf32> to vector<8xf32>
    %216 = vector.shape_cast %215 : vector<8xf32> to vector<8x1xf32>
    %217 = arith.addf %214, %216 : vector<8x1xf32>
    %c3_151 = arith.constant 3 : index
    %c0_152 = arith.constant 0 : index
    %c0_153 = arith.constant 0 : index
    %218 = vector.load %arg18[%c3_151, %c0_152, %c0_153] : memref<4x8x1xf32, #tpu.memory_space<vmem>>, vector<1x8x1xf32>
    %219 = vector.shape_cast %218 : vector<1x8x1xf32> to vector<8x1xf32>
    %220 = vector.shape_cast %217 : vector<8x1xf32> to vector<1x8x1xf32>
    tpu.vector_store %arg18[%c3_151, %c0_152, %c0_153], %220 {strides = array<i32>} : memref<4x8x1xf32, #tpu.memory_space<vmem>>, vector<1x8x1xf32>,
    %c3_154 = arith.constant 3 : index
    %c0_155 = arith.constant 0 : index
    %c0_156 = arith.constant 0 : index
    %221 = vector.load %arg19[%c3_154, %c0_155, %c0_156] : memref<4x8x8xf32, #tpu.memory_space<vmem>>, vector<1x8x8xf32>
    %222 = vector.shape_cast %221 : vector<1x8x8xf32> to vector<8x8xf32>
    %223 = vector.broadcast %208 : vector<8x1xf32> to vector<8x8xf32>
    %224 = arith.mulf %223, %222 : vector<8x8xf32>
    %225 = arith.truncf %211 : vector<8x16xf32> to vector<8x16xbf16>
    %226 = arith.truncf %197 : vector<16x8xf32> to vector<16x8xbf16>
    %cst_157 = arith.constant dense<0.000000e+00> : vector<8x8xf32>
    %227 = tpu.matmul %225, %226, %cst_157 {dimension_numbers = #tpu.dot_dimension_numbers<[1], [0], [0], [1], [0, 0, 1, 1], [], []>} : vector<8x16xbf16>, vector<16x8xbf16>, vector<8x8xf32> -> vector<8x8xf32>
    %228 = arith.addf %224, %227 : vector<8x8xf32>
    %c3_158 = arith.constant 3 : index
    %c0_159 = arith.constant 0 : index
    %c0_160 = arith.constant 0 : index
    %229 = vector.load %arg19[%c3_158, %c0_159, %c0_160] : memref<4x8x8xf32, #tpu.memory_space<vmem>>, vector<1x8x8xf32>
    %230 = vector.shape_cast %229 : vector<1x8x8xf32> to vector<8x8xf32>
    %231 = vector.shape_cast %228 : vector<8x8xf32> to vector<1x8x8xf32>
    tpu.vector_store %arg19[%c3_158, %c0_159, %c0_160], %231 {strides = array<i32>} : memref<4x8x8xf32, #tpu.memory_space<vmem>>, vector<1x8x8xf32>,
    %c3_161 = arith.constant 3 : index
    %c0_162 = arith.constant 0 : index
    %c0_163 = arith.constant 0 : index
    %232 = vector.load %arg17[%c3_161, %c0_162, %c0_163] : memref<4x8x1xf32, #tpu.memory_space<vmem>>, vector<1x8x1xf32>
    %233 = vector.shape_cast %232 : vector<1x8x1xf32> to vector<8x1xf32>
    %234 = vector.shape_cast %206 : vector<8x1xf32> to vector<1x8x1xf32>
    tpu.vector_store %arg17[%c3_161, %c0_162, %c0_163], %234 {strides = array<i32>} : memref<4x8x1xf32, #tpu.memory_space<vmem>>, vector<1x8x1xf32>,
    %c0_i32_164 = arith.constant 0 : i32
    %235 = arith.cmpi eq, %arg1, %c0_i32_164 : i32
    %236 = arith.extui %235 : i1 to i32
    %c0_i32_165 = arith.constant 0 : i32
    %237 = arith.cmpi ne, %236, %c0_i32_165 : i32
    scf.if %237 {
      %c0_166 = arith.constant 0 : index
      %c0_167 = arith.constant 0 : index
      %238 = vector.load %arg11[%c0_166, %c0_167] : memref<1x32xf32, #tpu.memory_space<vmem>>, vector<1x32xf32>
      %c0_168 = arith.constant 0 : index
      %c0_169 = arith.constant 0 : index
      %c0_170 = arith.constant 0 : index
      %239 = vector.load %arg19[%c0_168, %c0_169, %c0_170] : memref<4x8x8xf32, #tpu.memory_space<vmem>>, vector<1x8x8xf32>
      %240 = vector.shape_cast %239 : vector<1x8x8xf32> to vector<8x8xf32>
      %c0_171 = arith.constant 0 : index
      %c0_172 = arith.constant 0 : index
      %c0_173 = arith.constant 0 : index
      %241 = vector.load %arg18[%c0_171, %c0_172, %c0_173] : memref<4x8x1xf32, #tpu.memory_space<vmem>>, vector<1x8x1xf32>
      %242 = vector.shape_cast %241 : vector<1x8x1xf32> to vector<8x1xf32>
      %243 = tpu.reciprocal %242 {approx = true} : vector<8x1xf32> -> vector<8x1xf32>
      %244 = vector.broadcast %243 : vector<8x1xf32> to vector<8x8xf32>
      %245 = arith.mulf %240, %244 : vector<8x8xf32>
      %246 = arith.truncf %245 : vector<8x8xf32> to vector<8x8xbf16>
      %c0_174 = arith.constant 0 : index
      %c0_175 = arith.constant 0 : index
      %c0_176 = arith.constant 0 : index
      %247 = vector.load %arg10[%c0_174, %c0_175, %c0_176] : memref<4x8x32xbf16, #tpu.memory_space<vmem>>, vector<1x8x32xbf16>
      %248 = vector.shape_cast %247 : vector<1x8x32xbf16> to vector<8x32xbf16>
      %cst_177 = arith.constant dense<0.000000e+00> : vector<8x32xf32>
      %249 = tpu.matmul %246, %248, %cst_177 {dimension_numbers = #tpu.dot_dimension_numbers<[1], [0], [0], [1], [0, 0, 1, 1], [], []>} : vector<8x8xbf16>, vector<8x32xbf16>, vector<8x32xf32> -> vector<8x32xf32>
      %250 = vector.broadcast %238 : vector<1x32xf32> to vector<8x32xf32>
      %251 = arith.addf %250, %249 : vector<8x32xf32>
      %c1_178 = arith.constant 1 : index
      %c0_179 = arith.constant 0 : index
      %c0_180 = arith.constant 0 : index
      %252 = vector.load %arg19[%c1_178, %c0_179, %c0_180] : memref<4x8x8xf32, #tpu.memory_space<vmem>>, vector<1x8x8xf32>
      %253 = vector.shape_cast %252 : vector<1x8x8xf32> to vector<8x8xf32>
      %c1_181 = arith.constant 1 : index
      %c0_182 = arith.constant 0 : index
      %c0_183 = arith.constant 0 : index
      %254 = vector.load %arg18[%c1_181, %c0_182, %c0_183] : memref<4x8x1xf32, #tpu.memory_space<vmem>>, vector<1x8x1xf32>
      %255 = vector.shape_cast %254 : vector<1x8x1xf32> to vector<8x1xf32>
      %256 = tpu.reciprocal %255 {approx = true} : vector<8x1xf32> -> vector<8x1xf32>
      %257 = vector.broadcast %256 : vector<8x1xf32> to vector<8x8xf32>
      %258 = arith.mulf %253, %257 : vector<8x8xf32>
      %259 = arith.truncf %258 : vector<8x8xf32> to vector<8x8xbf16>
      %c1_184 = arith.constant 1 : index
      %c0_185 = arith.constant 0 : index
      %c0_186 = arith.constant 0 : index
      %260 = vector.load %arg10[%c1_184, %c0_185, %c0_186] : memref<4x8x32xbf16, #tpu.memory_space<vmem>>, vector<1x8x32xbf16>
      %261 = vector.shape_cast %260 : vector<1x8x32xbf16> to vector<8x32xbf16>
      %cst_187 = arith.constant dense<0.000000e+00> : vector<8x32xf32>
      %262 = tpu.matmul %259, %261, %cst_187 {dimension_numbers = #tpu.dot_dimension_numbers<[1], [0], [0], [1], [0, 0, 1, 1], [], []>} : vector<8x8xbf16>, vector<8x32xbf16>, vector<8x32xf32> -> vector<8x32xf32>
      %263 = arith.addf %251, %262 : vector<8x32xf32>
      %c2_188 = arith.constant 2 : index
      %c0_189 = arith.constant 0 : index
      %c0_190 = arith.constant 0 : index
      %264 = vector.load %arg19[%c2_188, %c0_189, %c0_190] : memref<4x8x8xf32, #tpu.memory_space<vmem>>, vector<1x8x8xf32>
      %265 = vector.shape_cast %264 : vector<1x8x8xf32> to vector<8x8xf32>
      %c2_191 = arith.constant 2 : index
      %c0_192 = arith.constant 0 : index
      %c0_193 = arith.constant 0 : index
      %266 = vector.load %arg18[%c2_191, %c0_192, %c0_193] : memref<4x8x1xf32, #tpu.memory_space<vmem>>, vector<1x8x1xf32>
      %267 = vector.shape_cast %266 : vector<1x8x1xf32> to vector<8x1xf32>
      %268 = tpu.reciprocal %267 {approx = true} : vector<8x1xf32> -> vector<8x1xf32>
      %269 = vector.broadcast %268 : vector<8x1xf32> to vector<8x8xf32>
      %270 = arith.mulf %265, %269 : vector<8x8xf32>
      %271 = arith.truncf %270 : vector<8x8xf32> to vector<8x8xbf16>
      %c2_194 = arith.constant 2 : index
      %c0_195 = arith.constant 0 : index
      %c0_196 = arith.constant 0 : index
      %272 = vector.load %arg10[%c2_194, %c0_195, %c0_196] : memref<4x8x32xbf16, #tpu.memory_space<vmem>>, vector<1x8x32xbf16>
      %273 = vector.shape_cast %272 : vector<1x8x32xbf16> to vector<8x32xbf16>
      %cst_197 = arith.constant dense<0.000000e+00> : vector<8x32xf32>
      %274 = tpu.matmul %271, %273, %cst_197 {dimension_numbers = #tpu.dot_dimension_numbers<[1], [0], [0], [1], [0, 0, 1, 1], [], []>} : vector<8x8xbf16>, vector<8x32xbf16>, vector<8x32xf32> -> vector<8x32xf32>
      %275 = arith.addf %263, %274 : vector<8x32xf32>
      %c3_198 = arith.constant 3 : index
      %c0_199 = arith.constant 0 : index
      %c0_200 = arith.constant 0 : index
      %276 = vector.load %arg19[%c3_198, %c0_199, %c0_200] : memref<4x8x8xf32, #tpu.memory_space<vmem>>, vector<1x8x8xf32>
      %277 = vector.shape_cast %276 : vector<1x8x8xf32> to vector<8x8xf32>
      %c3_201 = arith.constant 3 : index
      %c0_202 = arith.constant 0 : index
      %c0_203 = arith.constant 0 : index
      %278 = vector.load %arg18[%c3_201, %c0_202, %c0_203] : memref<4x8x1xf32, #tpu.memory_space<vmem>>, vector<1x8x1xf32>
      %279 = vector.shape_cast %278 : vector<1x8x1xf32> to vector<8x1xf32>
      %280 = tpu.reciprocal %279 {approx = true} : vector<8x1xf32> -> vector<8x1xf32>
      %281 = vector.broadcast %280 : vector<8x1xf32> to vector<8x8xf32>
      %282 = arith.mulf %277, %281 : vector<8x8xf32>
      %283 = arith.truncf %282 : vector<8x8xf32> to vector<8x8xbf16>
      %c3_204 = arith.constant 3 : index
      %c0_205 = arith.constant 0 : index
      %c0_206 = arith.constant 0 : index
      %284 = vector.load %arg10[%c3_204, %c0_205, %c0_206] : memref<4x8x32xbf16, #tpu.memory_space<vmem>>, vector<1x8x32xbf16>
      %285 = vector.shape_cast %284 : vector<1x8x32xbf16> to vector<8x32xbf16>
      %cst_207 = arith.constant dense<0.000000e+00> : vector<8x32xf32>
      %286 = tpu.matmul %283, %285, %cst_207 {dimension_numbers = #tpu.dot_dimension_numbers<[1], [0], [0], [1], [0, 0, 1, 1], [], []>} : vector<8x8xbf16>, vector<8x32xbf16>, vector<8x32xf32> -> vector<8x32xf32>
      %287 = arith.addf %275, %286 : vector<8x32xf32>
      %c0_208 = arith.constant 0 : index
      %c0_209 = arith.constant 0 : index
      %288 = vector.load %arg12[%c0_208, %c0_209] : memref<1x32xf32, #tpu.memory_space<vmem>>, vector<1x32xf32>
      %c0_210 = arith.constant 0 : index
      %c0_211 = arith.constant 0 : index
      %289 = vector.load %arg13[%c0_210, %c0_211] : memref<1x32xf32, #tpu.memory_space<vmem>>, vector<1x32xf32>
      %cst_212 = arith.constant dense<0.000000e+00> : vector<8xf32>
      %290 = vector.multi_reduction <add>, %287, %cst_212 [1] : vector<8x32xf32> to vector<8xf32>
      %291 = vector.shape_cast %290 : vector<8xf32> to vector<8x1xf32>
      %cst_213 = arith.constant 3.200000e+01 : f32
      %292 = vector.broadcast %cst_213 : f32 to vector<8x1xf32>
      %293 = arith.divf %291, %292 : vector<8x1xf32>
      %294 = vector.broadcast %293 : vector<8x1xf32> to vector<8x32xf32>
      %295 = arith.subf %287, %294 : vector<8x32xf32>
      %296 = arith.mulf %295, %295 : vector<8x32xf32>
      %cst_214 = arith.constant dense<0.000000e+00> : vector<8xf32>
      %297 = vector.multi_reduction <add>, %296, %cst_214 [1] : vector<8x32xf32> to vector<8xf32>
      %298 = vector.shape_cast %297 : vector<8xf32> to vector<8x1xf32>
      %cst_215 = arith.constant 3.200000e+01 : f32
      %299 = vector.broadcast %cst_215 : f32 to vector<8x1xf32>
      %300 = arith.divf %298, %299 : vector<8x1xf32>
      %301 = vector.broadcast %293 : vector<8x1xf32> to vector<8x32xf32>
      %302 = arith.subf %287, %301 : vector<8x32xf32>
      %cst_216 = arith.constant 9.99999974E-6 : f32
      %303 = vector.broadcast %cst_216 : f32 to vector<8x1xf32>
      %304 = arith.addf %300, %303 : vector<8x1xf32>
      %305 = math.rsqrt %304 : vector<8x1xf32>
      %306 = vector.broadcast %305 : vector<8x1xf32> to vector<8x32xf32>
      %307 = arith.mulf %302, %306 : vector<8x32xf32>
      %308 = vector.broadcast %288 : vector<1x32xf32> to vector<8x32xf32>
      %309 = arith.mulf %307, %308 : vector<8x32xf32>
      %310 = vector.broadcast %289 : vector<1x32xf32> to vector<8x32xf32>
      %311 = arith.addf %309, %310 : vector<8x32xf32>
      %312 = arith.truncf %311 : vector<8x32xf32> to vector<8x32xbf16>
      %c0_217 = arith.constant 0 : index
      %c0_218 = arith.constant 0 : index
      %313 = vector.load %arg14[%c0_217, %c0_218] : memref<32x64xbf16, #tpu.memory_space<vmem>>, vector<32x64xbf16>
      %cst_219 = arith.constant dense<0.000000e+00> : vector<8x64xf32>
      %314 = tpu.matmul %312, %313, %cst_219 {dimension_numbers = #tpu.dot_dimension_numbers<[1], [0], [0], [1], [0, 0, 1, 1], [], []>} : vector<8x32xbf16>, vector<32x64xbf16>, vector<8x64xf32> -> vector<8x64xf32>
      %cst_220 = arith.constant 5.000000e-01 : f32
      %315 = vector.broadcast %cst_220 : f32 to vector<8x64xf32>
      %316 = arith.mulf %315, %314 : vector<8x64xf32>
      %cst_221 = arith.constant 0.636619746 : f32
      %317 = math.sqrt %cst_221 : f32
      %cst_222 = arith.constant 4.471500e-02 : f32
      %318 = vector.broadcast %cst_222 : f32 to vector<8x64xf32>
      %319 = arith.mulf %318, %314 : vector<8x64xf32>
      %320 = arith.mulf %319, %314 : vector<8x64xf32>
      %321 = arith.mulf %320, %314 : vector<8x64xf32>
      %322 = arith.addf %314, %321 : vector<8x64xf32>
      %323 = vector.broadcast %317 : f32 to vector<8x64xf32>
      %324 = arith.mulf %323, %322 : vector<8x64xf32>
      %325 = math.tanh %324 : vector<8x64xf32>
      %cst_223 = arith.constant 1.000000e+00 : f32
      %326 = vector.broadcast %cst_223 : f32 to vector<8x64xf32>
      %327 = arith.addf %326, %325 : vector<8x64xf32>
      %328 = arith.mulf %316, %327 : vector<8x64xf32>
      %329 = arith.truncf %328 : vector<8x64xf32> to vector<8x64xbf16>
      %c0_224 = arith.constant 0 : index
      %c0_225 = arith.constant 0 : index
      %330 = vector.load %arg15[%c0_224, %c0_225] : memref<64x32xbf16, #tpu.memory_space<vmem>>, vector<64x32xbf16>
      %cst_226 = arith.constant dense<0.000000e+00> : vector<8x32xf32>
      %331 = tpu.matmul %329, %330, %cst_226 {dimension_numbers = #tpu.dot_dimension_numbers<[1], [0], [0], [1], [0, 0, 1, 1], [], []>} : vector<8x64xbf16>, vector<64x32xbf16>, vector<8x32xf32> -> vector<8x32xf32>
      %c0_227 = arith.constant 0 : index
      %c0_228 = arith.constant 0 : index
      %c0_229 = arith.constant 0 : index
      %332 = vector.load %arg16[%c0_227, %c0_228, %c0_229] : memref<1x8x32xf32, #tpu.memory_space<vmem>>, vector<1x8x32xf32>
      %333 = vector.shape_cast %332 : vector<1x8x32xf32> to vector<8x32xf32>
      %334 = vector.shape_cast %331 : vector<8x32xf32> to vector<1x8x32xf32>
      tpu.vector_store %arg16[%c0_227, %c0_228, %c0_229], %334 {strides = array<i32>} : memref<1x8x32xf32, #tpu.memory_space<vmem>>, vector<1x8x32xf32>,
    } else {
    }
    return
  }
  func.func @transform_0(%arg0: i32, %arg1: i32) -> (i32, i32, i32) {
    %c0_i32 = arith.constant 0 : i32
    %c0_i32_0 = arith.constant 0 : i32
    return %arg0, %arg1, %c0_i32 : i32, i32, i32
  }
  func.func @transform_1(%arg0: i32, %arg1: i32) -> (i32, i32, i32) {
    %c0_i32 = arith.constant 0 : i32
    %c0_i32_0 = arith.constant 0 : i32
    %c0_i32_1 = arith.constant 0 : i32
    %c0_i32_2 = arith.constant 0 : i32
    return %c0_i32, %c0_i32_0, %c0_i32_1 : i32, i32, i32
  }
  func.func @transform_2(%arg0: i32, %arg1: i32) -> (i32, i32) {
    %c0_i32 = arith.constant 0 : i32
    %c0_i32_0 = arith.constant 0 : i32
    %c0_i32_1 = arith.constant 0 : i32
    return %c0_i32, %c0_i32_0 : i32, i32
  }
  func.func @transform_3(%arg0: i32, %arg1: i32) -> (i32, i32) {
    %c0_i32 = arith.constant 0 : i32
    %c0_i32_0 = arith.constant 0 : i32
    %c0_i32_1 = arith.constant 0 : i32
    return %c0_i32, %c0_i32_0 : i32, i32
  }
  func.func @transform_4(%arg0: i32, %arg1: i32) -> (i32, i32, i32) {
    %c0_i32 = arith.constant 0 : i32
    %c0_i32_0 = arith.constant 0 : i32
    %c0_i32_1 = arith.constant 0 : i32
    %c0_i32_2 = arith.constant 0 : i32
    return %c0_i32, %c0_i32_0, %c0_i32_1 : i32, i32, i32
  }
  func.func @transform_5(%arg0: i32, %arg1: i32) -> (i32, i32, i32) {
    %c0_i32 = arith.constant 0 : i32
    %c0_i32_0 = arith.constant 0 : i32
    %c0_i32_1 = arith.constant 0 : i32
    %c0_i32_2 = arith.constant 0 : i32
    return %c0_i32, %c0_i32_0, %c0_i32_1 : i32, i32, i32
  }
  func.func @transform_6(%arg0: i32, %arg1: i32) -> (i32, i32, i32) {
    %c0_i32 = arith.constant 0 : i32
    %c0_i32_0 = arith.constant 0 : i32
    %c0_i32_1 = arith.constant 0 : i32
    %c0_i32_2 = arith.constant 0 : i32
    return %c0_i32, %c0_i32_0, %c0_i32_1 : i32, i32, i32
  }
  func.func @transform_7(%arg0: i32, %arg1: i32) -> (i32, i32, i32) {
    %c0_i32 = arith.constant 0 : i32
    %c0_i32_0 = arith.constant 0 : i32
    %c0_i32_1 = arith.constant 0 : i32
    %c0_i32_2 = arith.constant 0 : i32
    return %c0_i32, %c0_i32_0, %c0_i32_1 : i32, i32, i32
  }
  func.func @transform_8(%arg0: i32, %arg1: i32) -> (i32, i32, i32) {
    %c0_i32 = arith.constant 0 : i32
    %c0_i32_0 = arith.constant 0 : i32
    %c0_i32_1 = arith.constant 0 : i32
    %c0_i32_2 = arith.constant 0 : i32
    return %c0_i32, %c0_i32_0, %c0_i32_1 : i32, i32, i32
  }
  func.func @transform_9(%arg0: i32, %arg1: i32) -> (i32, i32) {
    %c0_i32 = arith.constant 0 : i32
    %c0_i32_0 = arith.constant 0 : i32
    %c0_i32_1 = arith.constant 0 : i32
    return %c0_i32, %c0_i32_0 : i32, i32
  }
  func.func @transform_10(%arg0: i32, %arg1: i32) -> (i32, i32) {
    %c0_i32 = arith.constant 0 : i32
    %c0_i32_0 = arith.constant 0 : i32
    %c0_i32_1 = arith.constant 0 : i32
    return %c0_i32, %c0_i32_0 : i32, i32
  }
  func.func @transform_11(%arg0: i32, %arg1: i32) -> (i32, i32) {
    %c0_i32 = arith.constant 0 : i32
    %c0_i32_0 = arith.constant 0 : i32
    %c0_i32_1 = arith.constant 0 : i32
    return %c0_i32, %c0_i32_0 : i32, i32
  }
  func.func @transform_12(%arg0: i32, %arg1: i32) -> (i32, i32) {
    %c0_i32 = arith.constant 0 : i32
    %c0_i32_0 = arith.constant 0 : i32
    %c0_i32_1 = arith.constant 0 : i32
    return %c0_i32, %c0_i32_0 : i32, i32
  }
  func.func @transform_13(%arg0: i32, %arg1: i32) -> (i32, i32) {
    %c0_i32 = arith.constant 0 : i32
    %c0_i32_0 = arith.constant 0 : i32
    %c0_i32_1 = arith.constant 0 : i32
    return %c0_i32, %c0_i32_0 : i32, i32
  }
  func.func @transform_14(%arg0: i32, %arg1: i32) -> (i32, i32, i32) {
    %c0_i32 = arith.constant 0 : i32
    %c0_i32_0 = arith.constant 0 : i32
    %c0_i32_1 = arith.constant 0 : i32
    return %arg0, %c0_i32, %c0_i32_0 : i32, i32, i32
  }
}

</mosaic_0001>

<llo_original>
// kernel: tpu_custom_call.1
$region0: #{tpu_custom_call.1}
  #allocation0 [shape = 'u32[]', space=smem, size = 0x4, offset = 0x4, fixed_abs, tag = 'smem constant byte address 0x4 - core index']
  #allocation1 [shape = 'u32[72,128]{1,0:T(1,128)}', space=vmem, size = 0x9000, scoped, tag = 'internal scratch']
  #allocation2 [shape = 'f32[4,8,1]{2,1,0:T(8,128)}', space=vmem, size = 0x4000, scoped, tag = 'scratch operand']
  #allocation3 [shape = 'f32[4,8,1]{2,1,0:T(8,128)}', space=vmem, size = 0x4000, scoped, tag = 'scratch operand']
  #allocation4 [shape = 'f32[4,8,8]{2,1,0:T(8,128)}', space=vmem, size = 0x4000, scoped, tag = 'scratch operand']
  %s0 = inlined_call_operand.vmem [shape: bf16[2,16,32], index: 0, kind: input, shape index: {}]
  %s1 = inlined_call_operand.vmem [shape: bf16[4,8,8], index: 1, kind: input, shape index: {}]
  %s2 = inlined_call_operand.vmem [shape: f32[1,32], index: 2, kind: input, shape index: {}]
  %s3 = inlined_call_operand.vmem [shape: f32[1,32], index: 3, kind: input, shape index: {}]
  %s4 = inlined_call_operand.vmem [shape: bf16[4,32,8], index: 4, kind: input, shape index: {}]
  %s5 = inlined_call_operand.vmem [shape: f32[4,1,8], index: 5, kind: input, shape index: {}]
  %s6 = inlined_call_operand.vmem [shape: bf16[4,32,8], index: 6, kind: input, shape index: {}]
  %s7 = inlined_call_operand.vmem [shape: f32[4,1,8], index: 7, kind: input, shape index: {}]
  %s8 = inlined_call_operand.vmem [shape: bf16[4,8,32], index: 8, kind: input, shape index: {}]
  %s9 = inlined_call_operand.vmem [shape: f32[1,32], index: 9, kind: input, shape index: {}]
  %s10 = inlined_call_operand.vmem [shape: f32[1,32], index: 10, kind: input, shape index: {}]
  %s11 = inlined_call_operand.vmem [shape: f32[1,32], index: 11, kind: input, shape index: {}]
  %s12 = inlined_call_operand.vmem [shape: bf16[32,64], index: 12, kind: input, shape index: {}]
  %s13 = inlined_call_operand.vmem [shape: bf16[64,32], index: 13, kind: input, shape index: {}]
  %s14 = inlined_call_operand.hbm [shape: f32[2,8,32], index: 14, kind: output, shape index: {}]
  %s15 = sld [smem:[#allocation0]]
  $region97: #{tpu_custom_call.1} parent=0
    _
  %s17 = ssub.s32 1, %s15
  %s18 = scalar_select 0, %s17, %s15
  $region1: #{tpu_custom_call.1} parent=0
    #allocation5 [shape = 'u8[8192]{0}', space=vmem, size = 0x2000, scoped, tag = 'output window, operand 0']
    #allocation6 [shape = 's32[2]{0}', space=sflag, size = 0x8, scoped, tag = 'scoped memory for tpu_custom_call.1']
    %19 = vsyncpa [#allocation6], 0
    %s20 = scalar_lea.sflag [#allocation6], 1
    %21 = vsyncpa %s20, 0
    loop: start=0, step=1, limit=4
    $region2: #{tpu_custom_call.1} parent=1 // loop_pre_header
      _
    $region3: #{tpu_custom_call.1} parent=1 // loop_header
      %s23 = sphi 0, %s27
      %p24 = scmp.ge.s32.totalorder %s23, 4
      %s30 = sphi 0, %s42
      %s31 = sphi 0, %s38
      %s32 = sphi 0, %s30
      %s33 = sphi 0, %s31
      %s34 = sphi 0, %s32
      %s35 = sphi 0, %s33
      %s47 = sphi 0, %s49
      %s50 = sphi 0, %s47
      %s51 = sphi 0, %s50
      %s67 = sphi 0, %s51
      %s71 = sphi 0, %s71
      %s73 = sphi 0, %s71
      %s74 = sphi 0, %s73
      %s88 = sphi 0, %s74
      %s92 = sphi 0, %s92
      %s94 = sphi 0, %s92
      %s95 = sphi 0, %s94
      %s109 = sphi 0, %s95
      %s113 = sphi 0, %s113
      %s115 = sphi 0, %s113
      %s116 = sphi 0, %s115
      %s130 = sphi 0, %s116
      %s134 = sphi 0, %s134
      %s136 = sphi 0, %s134
      %s137 = sphi 0, %s136
      %s151 = sphi 0, %s137
      %s155 = sphi 0, %s155
      %s157 = sphi 0, %s155
      %s158 = sphi 0, %s157
      %s172 = sphi 0, %s158
      %s176 = sphi 0, %s176
      %s178 = sphi 0, %s176
      %s179 = sphi 0, %s178
      %s193 = sphi 0, %s179
      %s197 = sphi 0, %s197
      %s199 = sphi 0, %s197
      %s200 = sphi 0, %s199
      %s214 = sphi 0, %s200
      %s218 = sphi 0, %s218
      %s220 = sphi 0, %s218
      %s221 = sphi 0, %s220
      %s235 = sphi 0, %s221
      %s239 = sphi 0, %s239
      %s241 = sphi 0, %s239
      %s242 = sphi 0, %s241
      %s256 = sphi 0, %s242
      %s260 = sphi 0, %s260
      %s262 = sphi 0, %s260
      %s263 = sphi 0, %s262
      %s277 = sphi 0, %s263
      %s281 = sphi 0, %s281
      %s283 = sphi 0, %s281
      %s284 = sphi 0, %s283
      %s298 = sphi 0, %s284
      %s302 = sphi 0, %s302
      %s304 = sphi 0, %s302
      %s305 = sphi 0, %s304
      %s319 = sphi 0, %s305
      %s323 = sphi 0, %s323
      %s325 = sphi 0, %s323
      %s326 = sphi 0, %s325
      %s340 = sphi 0, %s326
      %s346 = sphi 0, %s348
      %s349 = sphi 0, %s346
      %s350 = sphi 0, %s349
      %s366 = sphi 0, %s350
    $region4: #{tpu_custom_call.1} parent=1 // loop_header_branch
      %26 = sbr.rel (%p24) target = $region8
    $region5: #{tpu_custom_call.1} parent=1 // loop_body
      %s28 = ssub.s32 %s23, 1
      %s29 = ssub.s32 %s23, 2
      %s36 = sadd.s32 1, %s31
      %p37 = scmp.ge.s32.totalorder %s36, 1
      %s38 = scalar_select %p37, 0, %s36
      %s39 = sadd.s32 1, %s30
      %s40 = scalar_select %p37, %s39, %s30
      %p41 = scmp.ge.s32.totalorder %s40, 2
      %s42 = scalar_select %p41, 0, %s40
      %s43 = ssub.s32 %s30, %s42
      %s44 = ssub.s32 %s31, %s38
      %s45 = sor.u32 %s43, %s44
      %p46 = scmp.eq.s32.totalorder %s45, 0
      %s48 = sadd.s32 %s47, 1
      %s49 = scalar_select %p46, %s47, %s48
      %p52 = pneg %p46
      %p53 = scmp.eq.s32.totalorder %s23, 1
      %p54 = por %p52, %p53
      %p55 = scmp.ne.s32.totalorder %s47, %s50
      %p56 = scmp.eq.s32.totalorder %s23, 0
      %p57 = por %p55, %p56
      %p58 = scmp.ne.s32.totalorder %s47, %s50
      %p59 = scmp.eq.s32.totalorder %s28, 1
      %p60 = por %p58, %p59
      %p61 = scmp.ne.s32.totalorder %s50, %s51
      %p62 = scmp.eq.s32.totalorder %s28, 0
      %p63 = por %p61, %p62
      %p64 = scmp.ne.s32.totalorder %s50, %s51
      %p65 = scmp.eq.s32.totalorder %s29, 1
      %p66 = por %p64, %p65
      %p68 = scmp.ne.s32.totalorder %s51, %s67
      %p69 = scmp.eq.s32.totalorder %s29, 0
      %p70 = por %p68, %p69
      %s72 = sadd.s32 %s71, 1
      %p75 = scmp.eq.s32.totalorder %s23, 1
      %p76 = scmp.ne.s32.totalorder %s71, %s73
      %p77 = scmp.eq.s32.totalorder %s23, 0
      %p78 = por %p76, %p77
      %p79 = scmp.ne.s32.totalorder %s71, %s73
      %p80 = scmp.eq.s32.totalorder %s28, 1
      %p81 = por %p79, %p80
      %p82 = scmp.ne.s32.totalorder %s73, %s74
      %p83 = scmp.eq.s32.totalorder %s28, 0
      %p84 = por %p82, %p83
      %p85 = scmp.ne.s32.totalorder %s73, %s74
      %p86 = scmp.eq.s32.totalorder %s29, 1
      %p87 = por %p85, %p86
      %p89 = scmp.ne.s32.totalorder %s74, %s88
      %p90 = scmp.eq.s32.totalorder %s29, 0
      %p91 = por %p89, %p90
      %s93 = sadd.s32 %s92, 1
      %p96 = scmp.eq.s32.totalorder %s23, 1
      %p97 = scmp.ne.s32.totalorder %s92, %s94
      %p98 = scmp.eq.s32.totalorder %s23, 0
      %p99 = por %p97, %p98
      %p100 = scmp.ne.s32.totalorder %s92, %s94
      %p101 = scmp.eq.s32.totalorder %s28, 1
      %p102 = por %p100, %p101
      %p103 = scmp.ne.s32.totalorder %s94, %s95
      %p104 = scmp.eq.s32.totalorder %s28, 0
      %p105 = por %p103, %p104
      %p106 = scmp.ne.s32.totalorder %s94, %s95
      %p107 = scmp.eq.s32.totalorder %s29, 1
      %p108 = por %p106, %p107
      %p110 = scmp.ne.s32.totalorder %s95, %s109
      %p111 = scmp.eq.s32.totalorder %s29, 0
      %p112 = por %p110, %p111
      %s114 = sadd.s32 %s113, 1
      %p117 = scmp.eq.s32.totalorder %s23, 1
      %p118 = scmp.ne.s32.totalorder %s113, %s115
      %p119 = scmp.eq.s32.totalorder %s23, 0
      %p120 = por %p118, %p119
      %p121 = scmp.ne.s32.totalorder %s113, %s115
      %p122 = scmp.eq.s32.totalorder %s28, 1
      %p123 = por %p121, %p122
      %p124 = scmp.ne.s32.totalorder %s115, %s116
      %p125 = scmp.eq.s32.totalorder %s28, 0
      %p126 = por %p124, %p125
      %p127 = scmp.ne.s32.totalorder %s115, %s116
      %p128 = scmp.eq.s32.totalorder %s29, 1
      %p129 = por %p127, %p128
      %p131 = scmp.ne.s32.totalorder %s116, %s130
      %p132 = scmp.eq.s32.totalorder %s29, 0
      %p133 = por %p131, %p132
      %s135 = sadd.s32 %s134, 1
      %p138 = scmp.eq.s32.totalorder %s23, 1
      %p139 = scmp.ne.s32.totalorder %s134, %s136
      %p140 = scmp.eq.s32.totalorder %s23, 0
      %p141 = por %p139, %p140
      %p142 = scmp.ne.s32.totalorder %s134, %s136
      %p143 = scmp.eq.s32.totalorder %s28, 1
      %p144 = por %p142, %p143
      %p145 = scmp.ne.s32.totalorder %s136, %s137
      %p146 = scmp.eq.s32.totalorder %s28, 0
      %p147 = por %p145, %p146
      %p148 = scmp.ne.s32.totalorder %s136, %s137
      %p149 = scmp.eq.s32.totalorder %s29, 1
      %p150 = por %p148, %p149
      %p152 = scmp.ne.s32.totalorder %s137, %s151
      %p153 = scmp.eq.s32.totalorder %s29, 0
      %p154 = por %p152, %p153
      %s156 = sadd.s32 %s155, 1
      %p159 = scmp.eq.s32.totalorder %s23, 1
      %p160 = scmp.ne.s32.totalorder %s155, %s157
      %p161 = scmp.eq.s32.totalorder %s23, 0
      %p162 = por %p160, %p161
      %p163 = scmp.ne.s32.totalorder %s155, %s157
      %p164 = scmp.eq.s32.totalorder %s28, 1
      %p165 = por %p163, %p164
      %p166 = scmp.ne.s32.totalorder %s157, %s158
      %p167 = scmp.eq.s32.totalorder %s28, 0
      %p168 = por %p166, %p167
      %p169 = scmp.ne.s32.totalorder %s157, %s158
      %p170 = scmp.eq.s32.totalorder %s29, 1
      %p171 = por %p169, %p170
      %p173 = scmp.ne.s32.totalorder %s158, %s172
      %p174 = scmp.eq.s32.totalorder %s29, 0
      %p175 = por %p173, %p174
      %s177 = sadd.s32 %s176, 1
      %p180 = scmp.eq.s32.totalorder %s23, 1
      %p181 = scmp.ne.s32.totalorder %s176, %s178
      %p182 = scmp.eq.s32.totalorder %s23, 0
      %p183 = por %p181, %p182
      %p184 = scmp.ne.s32.totalorder %s176, %s178
      %p185 = scmp.eq.s32.totalorder %s28, 1
      %p186 = por %p184, %p185
      %p187 = scmp.ne.s32.totalorder %s178, %s179
      %p188 = scmp.eq.s32.totalorder %s28, 0
      %p189 = por %p187, %p188
      %p190 = scmp.ne.s32.totalorder %s178, %s179
      %p191 = scmp.eq.s32.totalorder %s29, 1
      %p192 = por %p190, %p191
      %p194 = scmp.ne.s32.totalorder %s179, %s193
      %p195 = scmp.eq.s32.totalorder %s29, 0
      %p196 = por %p194, %p195
      %s198 = sadd.s32 %s197, 1
      %p201 = scmp.eq.s32.totalorder %s23, 1
      %p202 = scmp.ne.s32.totalorder %s197, %s199
      %p203 = scmp.eq.s32.totalorder %s23, 0
      %p204 = por %p202, %p203
      %p205 = scmp.ne.s32.totalorder %s197, %s199
      %p206 = scmp.eq.s32.totalorder %s28, 1
      %p207 = por %p205, %p206
      %p208 = scmp.ne.s32.totalorder %s199, %s200
      %p209 = scmp.eq.s32.totalorder %s28, 0
      %p210 = por %p208, %p209
      %p211 = scmp.ne.s32.totalorder %s199, %s200
      %p212 = scmp.eq.s32.totalorder %s29, 1
      %p213 = por %p211, %p212
      %p215 = scmp.ne.s32.totalorder %s200, %s214
      %p216 = scmp.eq.s32.totalorder %s29, 0
      %p217 = por %p215, %p216
      %s219 = sadd.s32 %s218, 1
      %p222 = scmp.eq.s32.totalorder %s23, 1
      %p223 = scmp.ne.s32.totalorder %s218, %s220
      %p224 = scmp.eq.s32.totalorder %s23, 0
      %p225 = por %p223, %p224
      %p226 = scmp.ne.s32.totalorder %s218, %s220
      %p227 = scmp.eq.s32.totalorder %s28, 1
      %p228 = por %p226, %p227
      %p229 = scmp.ne.s32.totalorder %s220, %s221
      %p230 = scmp.eq.s32.totalorder %s28, 0
      %p231 = por %p229, %p230
      %p232 = scmp.ne.s32.totalorder %s220, %s221
      %p233 = scmp.eq.s32.totalorder %s29, 1
      %p234 = por %p232, %p233
      %p236 = scmp.ne.s32.totalorder %s221, %s235
      %p237 = scmp.eq.s32.totalorder %s29, 0
      %p238 = por %p236, %p237
      %s240 = sadd.s32 %s239, 1
      %p243 = scmp.eq.s32.totalorder %s23, 1
      %p244 = scmp.ne.s32.totalorder %s239, %s241
      %p245 = scmp.eq.s32.totalorder %s23, 0
      %p246 = por %p244, %p245
      %p247 = scmp.ne.s32.totalorder %s239, %s241
      %p248 = scmp.eq.s32.totalorder %s28, 1
      %p249 = por %p247, %p248
      %p250 = scmp.ne.s32.totalorder %s241, %s242
      %p251 = scmp.eq.s32.totalorder %s28, 0
      %p252 = por %p250, %p251
      %p253 = scmp.ne.s32.totalorder %s241, %s242
      %p254 = scmp.eq.s32.totalorder %s29, 1
      %p255 = por %p253, %p254
      %p257 = scmp.ne.s32.totalorder %s242, %s256
      %p258 = scmp.eq.s32.totalorder %s29, 0
      %p259 = por %p257, %p258
      %s261 = sadd.s32 %s260, 1
      %p264 = scmp.eq.s32.totalorder %s23, 1
      %p265 = scmp.ne.s32.totalorder %s260, %s262
      %p266 = scmp.eq.s32.totalorder %s23, 0
      %p267 = por %p265, %p266
      %p268 = scmp.ne.s32.totalorder %s260, %s262
      %p269 = scmp.eq.s32.totalorder %s28, 1
      %p270 = por %p268, %p269
      %p271 = scmp.ne.s32.totalorder %s262, %s263
      %p272 = scmp.eq.s32.totalorder %s28, 0
      %p273 = por %p271, %p272
      %p274 = scmp.ne.s32.totalorder %s262, %s263
      %p275 = scmp.eq.s32.totalorder %s29, 1
      %p276 = por %p274, %p275
      %p278 = scmp.ne.s32.totalorder %s263, %s277
      %p279 = scmp.eq.s32.totalorder %s29, 0
      %p280 = por %p278, %p279
      %s282 = sadd.s32 %s281, 1
      %p285 = scmp.eq.s32.totalorder %s23, 1
      %p286 = scmp.ne.s32.totalorder %s281, %s283
      %p287 = scmp.eq.s32.totalorder %s23, 0
      %p288 = por %p286, %p287
      %p289 = scmp.ne.s32.totalorder %s281, %s283
      %p290 = scmp.eq.s32.totalorder %s28, 1
      %p291 = por %p289, %p290
      %p292 = scmp.ne.s32.totalorder %s283, %s284
      %p293 = scmp.eq.s32.totalorder %s28, 0
      %p294 = por %p292, %p293
      %p295 = scmp.ne.s32.totalorder %s283, %s284
      %p296 = scmp.eq.s32.totalorder %s29, 1
      %p297 = por %p295, %p296
      %p299 = scmp.ne.s32.totalorder %s284, %s298
      %p300 = scmp.eq.s32.totalorder %s29, 0
      %p301 = por %p299, %p300
      %s303 = sadd.s32 %s302, 1
      %p306 = scmp.eq.s32.totalorder %s23, 1
      %p307 = scmp.ne.s32.totalorder %s302, %s304
      %p308 = scmp.eq.s32.totalorder %s23, 0
      %p309 = por %p307, %p308
      %p310 = scmp.ne.s32.totalorder %s302, %s304
      %p311 = scmp.eq.s32.totalorder %s28, 1
      %p312 = por %p310, %p311
      %p313 = scmp.ne.s32.totalorder %s304, %s305
      %p314 = scmp.eq.s32.totalorder %s28, 0
      %p315 = por %p313, %p314
      %p316 = scmp.ne.s32.totalorder %s304, %s305
      %p317 = scmp.eq.s32.totalorder %s29, 1
      %p318 = por %p316, %p317
      %p320 = scmp.ne.s32.totalorder %s305, %s319
      %p321 = scmp.eq.s32.totalorder %s29, 0
      %p322 = por %p320, %p321
      %s324 = sadd.s32 %s323, 1
      %p327 = scmp.eq.s32.totalorder %s23, 1
      %p328 = scmp.ne.s32.totalorder %s323, %s325
      %p329 = scmp.eq.s32.totalorder %s23, 0
      %p330 = por %p328, %p329
      %p331 = scmp.ne.s32.totalorder %s323, %s325
      %p332 = scmp.eq.s32.totalorder %s28, 1
      %p333 = por %p331, %p332
      %p334 = scmp.ne.s32.totalorder %s325, %s326
      %p335 = scmp.eq.s32.totalorder %s28, 0
      %p336 = por %p334, %p335
      %p337 = scmp.ne.s32.totalorder %s325, %s326
      %p338 = scmp.eq.s32.totalorder %s29, 1
      %p339 = por %p337, %p338
      %p341 = scmp.ne.s32.totalorder %s326, %s340
      %p342 = scmp.eq.s32.totalorder %s29, 0
      %p343 = por %p341, %p342
      %s344 = ssub.s32 %s30, %s42
      %p345 = scmp.eq.s32.totalorder %s344, 0
      %s347 = sadd.s32 %s346, 1
      %s348 = scalar_select %p345, %s346, %s347
      %p351 = pneg %p345
      %p352 = scmp.eq.s32.totalorder %s23, 1
      %p353 = por %p351, %p352
      %p354 = scmp.ne.s32.totalorder %s346, %s349
      %p355 = scmp.eq.s32.totalorder %s23, 0
      %p356 = por %p354, %p355
      %p357 = scmp.ne.s32.totalorder %s346, %s349
      %p358 = scmp.eq.s32.totalorder %s28, 1
      %p359 = por %p357, %p358
      %p360 = scmp.ne.s32.totalorder %s349, %s350
      %p361 = scmp.eq.s32.totalorder %s28, 0
      %p362 = por %p360, %p361
      %p363 = scmp.ne.s32.totalorder %s349, %s350
      %p364 = scmp.eq.s32.totalorder %s29, 1
      %p365 = por %p363, %p364
      %p367 = scmp.ne.s32.totalorder %s350, %s366
      %p368 = scmp.eq.s32.totalorder %s29, 0
      %p369 = por %p367, %p368
      %p370 = scmp.le.s32.totalorder 1, %s23
      %p371 = scmp.lt.s32.totalorder %s23, 3
      %p372 = pnand %p370, %p371
      %p373 = pneg %p372
      // Predicated region
      $region9: #{tpu_custom_call.1} parent=5 // pred_check
        _
      $region10: #{tpu_custom_call.1} parent=5 // pred_check_branch
        %375 = sbr.rel (%p372) target = $region12
      $region11: #{tpu_custom_call.1} parent=5 // pred_region
        %s376 = ssub.s32 %s23, 1
        // Predicated region
        $region13: #{tpu_custom_call.1} parent=11 // pred_check
          %p377 = pneg %p84
        $region14: #{tpu_custom_call.1} parent=11 // pred_check_branch
          %379 = sbr.rel (%p377) target = $region16
        $region15: #{tpu_custom_call.1} parent=11 // pred_region
          _
        $region16: #{tpu_custom_call.1} parent=11 // pred_fallthru
          _
        // Predicated region
        $region17: #{tpu_custom_call.1} parent=11 // pred_check
          %p380 = pneg %p105
        $region18: #{tpu_custom_call.1} parent=11 // pred_check_branch
          %382 = sbr.rel (%p380) target = $region20
        $region19: #{tpu_custom_call.1} parent=11 // pred_region
          _
        $region20: #{tpu_custom_call.1} parent=11 // pred_fallthru
          _
        // Predicated region
        $region21: #{tpu_custom_call.1} parent=11 // pred_check
          %p383 = pneg %p126
        $region22: #{tpu_custom_call.1} parent=11 // pred_check_branch
          %385 = sbr.rel (%p383) target = $region24
        $region23: #{tpu_custom_call.1} parent=11 // pred_region
          _
        $region24: #{tpu_custom_call.1} parent=11 // pred_fallthru
          _
        // Predicated region
        $region25: #{tpu_custom_call.1} parent=11 // pred_check
          %p386 = pneg %p147
        $region26: #{tpu_custom_call.1} parent=11 // pred_check_branch
          %388 = sbr.rel (%p386) target = $region28
        $region27: #{tpu_custom_call.1} parent=11 // pred_region
          _
        $region28: #{tpu_custom_call.1} parent=11 // pred_fallthru
          _
        // Predicated region
        $region29: #{tpu_custom_call.1} parent=11 // pred_check
          %p389 = pneg %p168
        $region30: #{tpu_custom_call.1} parent=11 // pred_check_branch
          %391 = sbr.rel (%p389) target = $region32
        $region31: #{tpu_custom_call.1} parent=11 // pred_region
          _
        $region32: #{tpu_custom_call.1} parent=11 // pred_fallthru
          _
        // Predicated region
        $region33: #{tpu_custom_call.1} parent=11 // pred_check
          %p392 = pneg %p189
        $region34: #{tpu_custom_call.1} parent=11 // pred_check_branch
          %394 = sbr.rel (%p392) target = $region36
        $region35: #{tpu_custom_call.1} parent=11 // pred_region
          _
        $region36: #{tpu_custom_call.1} parent=11 // pred_fallthru
          _
        // Predicated region
        $region37: #{tpu_custom_call.1} parent=11 // pred_check
          %p395 = pneg %p210
        $region38: #{tpu_custom_call.1} parent=11 // pred_check_branch
          %397 = sbr.rel (%p395) target = $region40
        $region39: #{tpu_custom_call.1} parent=11 // pred_region
          _
        $region40: #{tpu_custom_call.1} parent=11 // pred_fallthru
          _
        // Predicated region
        $region41: #{tpu_custom_call.1} parent=11 // pred_check
          %p398 = pneg %p231
        $region42: #{tpu_custom_call.1} parent=11 // pred_check_branch
          %400 = sbr.rel (%p398) target = $region44
        $region43: #{tpu_custom_call.1} parent=11 // pred_region
          _
        $region44: #{tpu_custom_call.1} parent=11 // pred_fallthru
          _
        // Predicated region
        $region45: #{tpu_custom_call.1} parent=11 // pred_check
          %p401 = pneg %p252
        $region46: #{tpu_custom_call.1} parent=11 // pred_check_branch
          %403 = sbr.rel (%p401) target = $region48
        $region47: #{tpu_custom_call.1} parent=11 // pred_region
          _
        $region48: #{tpu_custom_call.1} parent=11 // pred_fallthru
          _
        // Predicated region
        $region49: #{tpu_custom_call.1} parent=11 // pred_check
          %p404 = pneg %p273
        $region50: #{tpu_custom_call.1} parent=11 // pred_check_branch
          %406 = sbr.rel (%p404) target = $region52
        $region51: #{tpu_custom_call.1} parent=11 // pred_region
          _
        $region52: #{tpu_custom_call.1} parent=11 // pred_fallthru
          _
        // Predicated region
        $region53: #{tpu_custom_call.1} parent=11 // pred_check
          %p407 = pneg %p294
        $region54: #{tpu_custom_call.1} parent=11 // pred_check_branch
          %409 = sbr.rel (%p407) target = $region56
        $region55: #{tpu_custom_call.1} parent=11 // pred_region
          _
        $region56: #{tpu_custom_call.1} parent=11 // pred_fallthru
          _
        // Predicated region
        $region57: #{tpu_custom_call.1} parent=11 // pred_check
          %p410 = pneg %p315
        $region58: #{tpu_custom_call.1} parent=11 // pred_check_branch
          %412 = sbr.rel (%p410) target = $region60
        $region59: #{tpu_custom_call.1} parent=11 // pred_region
          _
        $region60: #{tpu_custom_call.1} parent=11 // pred_fallthru
          _
        // Predicated region
        $region61: #{tpu_custom_call.1} parent=11 // pred_check
          %p413 = pneg %p336
        $region62: #{tpu_custom_call.1} parent=11 // pred_check_branch
          %415 = sbr.rel (%p413) target = $region64
        $region63: #{tpu_custom_call.1} parent=11 // pred_region
          _
        $region64: #{tpu_custom_call.1} parent=11 // pred_fallthru
          _
      $region12: #{tpu_custom_call.1} parent=5 // pred_fallthru
        _
      %p416 = scmp.lt.s32.totalorder %s23, 2
      // Predicated region
      $region65: #{tpu_custom_call.1} parent=5 // pred_check
        %p417 = pneg %p416
      $region66: #{tpu_custom_call.1} parent=5 // pred_check_branch
        %419 = sbr.rel (%p417) target = $region68
      $region67: #{tpu_custom_call.1} parent=5 // pred_region
        // Predicated region
        $region69: #{tpu_custom_call.1} parent=67 // pred_check
          %p420 = pneg %p57
        $region70: #{tpu_custom_call.1} parent=67 // pred_check_branch
          %422 = sbr.rel (%p420) target = $region72
        $region71: #{tpu_custom_call.1} parent=67 // pred_region
          %s423 = smul.u32 2, %s31
          %p424 = scmp.lt.s32.totalorder %s30, 1
          %s425 = scalar_select %p424, %s30, 1
          %p426 = scmp.lt.s32.totalorder %s423, 1
          %s427 = scalar_select %p426, %s423, 1
          %s428 = smul.addr %s425, 2
          %s429 = sadd.s32 %s427, %s428
          %s430 = smul.addr %s429, 4
          %s431 = scalar_lea.vmem %s0, %s430
          %s432 = smul.u32 2, %s31
        $region72: #{tpu_custom_call.1} parent=67 // pred_fallthru
          _
      $region68: #{tpu_custom_call.1} parent=5 // pred_fallthru
        _
      %p433 = scmp.le.s32.totalorder 1, %s23
      %p434 = scmp.lt.s32.totalorder %s23, 3
      %p435 = pnand %p433, %p434
      %p436 = pneg %p435
      // Predicated region
      $region73: #{tpu_custom_call.1} parent=5 // pred_check
        _
      $region74: #{tpu_custom_call.1} parent=5 // pred_check_branch
        %438 = sbr.rel (%p435) target = $region76
      $region75: #{tpu_custom_call.1} parent=5 // pred_region
        %s439 = ssub.s32 %s23, 1
        %s440 = smul.u32 2, %s33
        %p441 = scmp.lt.s32.totalorder %s32, 1
        %s442 = scalar_select %p441, %s32, 1
        %p443 = scmp.lt.s32.totalorder %s440, 1
        %s444 = scalar_select %p443, %s440, 1
        %s445 = smul.addr %s442, 2
        %s446 = sadd.s32 %s444, %s445
        %s447 = smul.addr %s446, 4
        %s448 = scalar_lea.vmem %s0, %s447
        %p449 = pneg %p63
        %p450 = pneg %p60
        %p451 = pneg %p84
        %p452 = pneg %p81
        %p453 = pneg %p105
        %p454 = pneg %p102
        %p455 = pneg %p126
        %p456 = pneg %p123
        %p457 = pneg %p147
        %p458 = pneg %p144
        %p459 = pneg %p168
        %p460 = pneg %p165
        %p461 = pneg %p189
        %p462 = pneg %p186
        %p463 = pneg %p210
        %p464 = pneg %p207
        %p465 = pneg %p231
        %p466 = pneg %p228
        %p467 = pneg %p252
        %p468 = pneg %p249
        %p469 = pneg %p273
        %p470 = pneg %p270
        %p471 = pneg %p294
        %p472 = pneg %p291
        %p473 = pneg %p315
        %p474 = pneg %p312
        %p475 = pneg %p336
        %p476 = pneg %p333
        %p477 = pneg %p362
        %p478 = pneg %p359
        %s479 = sand.u32 %s349, 1
        %s480 = scalar_lea.sflag [#allocation6], %s479
        %s481 = sand.u32 %s349, 1
        %s482 = smul.addr %s481, 8
        %s483 = scalar_lea.vmem [#allocation5], %s482
        %s484 = smul.u32 2, %s33
        %p485 = scmp.lt.s32.totalorder %s32, 1
        %s486 = scalar_select %p485, %s32, 1
        %p487 = scmp.lt.s32.totalorder %s484, 1
        %s488 = scalar_select %p487, %s484, 1
        %s489 = smul.addr %s486, 2
        %s490 = sadd.s32 %s488, %s489
        %s491 = smul.addr %s490, 4
        %s492 = scalar_lea.vmem %s0, %s491
        %s493 = smul.u32 2, %s33
        %p495 = scmp.eq.s32.totalorder %s33, 0
        // Predicated region
        $region77: #{tpu_custom_call.1} parent=75 // pred_check
          %p496 = pneg %p495
        $region78: #{tpu_custom_call.1} parent=75 // pred_check_branch
          %498 = sbr.rel (%p496) target = $region80
        $region79: #{tpu_custom_call.1} parent=75 // pred_region
          %vm499 = vcmask 7168
          %500 = vst.msk [vmem:[#allocation2] sm:$0xff] %vm499, -inf
          %501 = vst.msk [vmem:[#allocation2 + $0x8] sm:$0xff] %vm499, -inf
          %502 = vst.msk [vmem:[#allocation2 + $0x10] sm:$0xff] %vm499, -inf
          %503 = vst.msk [vmem:[#allocation2 + $0x18] sm:$0xff] %vm499, -inf
          %504 = vst.msk [vmem:[#allocation3] sm:$0xff] %vm499, 0.0
          %505 = vst.msk [vmem:[#allocation3 + $0x8] sm:$0xff] %vm499, 0.0
          %506 = vst.msk [vmem:[#allocation3 + $0x10] sm:$0xff] %vm499, 0.0
          %507 = vst.msk [vmem:[#allocation3 + $0x18] sm:$0xff] %vm499, 0.0
          %vm508 = vcmask 64512
          %509 = vst.msk [vmem:[#allocation4] sm:$0xff] %vm508, 0.0
          %510 = vst.msk [vmem:[#allocation4 + $0x8] sm:$0xff] %vm508, 0.0
          %511 = vst.msk [vmem:[#allocation4 + $0x10] sm:$0xff] %vm508, 0.0
          %512 = vst.msk [vmem:[#allocation4 + $0x18] sm:$0xff] %vm508, 0.0
        $region80: #{tpu_custom_call.1} parent=75 // pred_fallthru
          _
        %v513 = vld [vmem:[%s492] sm:$0xf]
        %v514 = vld [vmem:[%s492 + $0x4] sm:$0xf]
        %v515 = vunpack.c.l.bf16 %v513
        %v516 = vunpack.c.l.bf16 %v514
        %v517 = vld [vmem:[%s2] sm:$0x1]
        %v518 = vld [vmem:[%s3] sm:$0x1]
        %vm519 = vcmask 261120
        %v520 = vsel %vm519, %v515, 0.0
        %521 = vadd.xlane.f32.xlu0 %v520
        %v522 = vpop.xlane.xlu0 %521
        %v523 = vsel %vm519, %v516, 0.0
        %524 = vadd.xlane.f32.xlu0 %v523
        %v525 = vpop.xlane.xlu0 %524
        %v526 = vrcp.pop 32.0
        %v527 = vmul.f32 32.0, %v526
        %v528 = vsub.f32 1.0, %v527
        %v529 = vmul.f32 %v526, %v528
        %v530 = vadd.f32 %v526, %v529
        %vm531 = vweird.f32 %v526
        %v532 = vsel %vm531, %v526, %v530
        %v533 = vmul.f32 %v522, %v532
        %v534 = vmul.f32 %v525, %v532
        %v535 = vsub.f32 %v515, %v533
        %v536 = vsub.f32 %v516, %v534
        %v537 = vmul.f32 %v535, %v535
        %v538 = vmul.f32 %v536, %v536
        %v539 = vsel %vm519, %v537, 0.0
        %540 = vadd.xlane.f32.xlu0 %v539
        %v541 = vpop.xlane.xlu0 %540
        %v542 = vsel %vm519, %v538, 0.0
        %543 = vadd.xlane.f32.xlu0 %v542
        %v544 = vpop.xlane.xlu0 %543
        %v545 = vmul.f32 %v541, %v532
        %v546 = vmul.f32 %v544, %v532
        %v547 = vadd.f32 %v545, 1e-05
        %v548 = vadd.f32 %v546, 1e-05
        %v549 = vrsqrt.pop %v547
        %v550 = vmul.f32 %v549, %v547
        %v551 = vmul.f32 %v550, %v549
        %v552 = vmul.f32 0.5, %v551
        %v553 = vsub.f32 1.5, %v552
        %v554 = vmul.f32 %v549, %v553
        %vm555 = vweird.f32 %v547
        %vm556 = vweird.f32 %v549
        %vm557 = vmor %vm555, %vm556
        %v558 = vsel %vm557, %v549, %v554
        %v559 = vrsqrt.pop %v548
        %v560 = vmul.f32 %v559, %v548
        %v561 = vmul.f32 %v560, %v559
        %v562 = vmul.f32 0.5, %v561
        %v563 = vsub.f32 1.5, %v562
        %v564 = vmul.f32 %v559, %v563
        %vm565 = vweird.f32 %v548
        %vm566 = vweird.f32 %v559
        %vm567 = vmor %vm565, %vm566
        %v568 = vsel %vm567, %v559, %v564
        %v569 = vmul.f32 %v535, %v558
        %v570 = vmul.f32 %v536, %v568
        %v572 = vperm.slane %v517, 0
        %v574 = vmul.f32 %v569, %v572
        %v575 = vmul.f32 %v570, %v572
        %v577 = vperm.slane %v518, 0
        %v579 = vadd.f32 %v574, %v577
        %v580 = vadd.f32 %v575, %v577
        %v581 = vpack.c.bf16 %v580, %v579
        %v582 = vld [vmem:[%s4] sm:$0xf]
        %v583 = vld [vmem:[%s4 + $0x4] sm:$0xf]
        %v584 = vld [vmem:[%s4 + $0x8] sm:$0xf]
        %v585 = vld [vmem:[%s4 + $0xc] sm:$0xf]
        %v586 = vld [vmem:[%s5] sm:$0x1]
        %v588 = vperm.slane %v586, 0
        %v594 = vunpack.c.l.b16 %v582
        %v595 = vunpack.c.l.b16 %v583
        %v596 = vunpack.c.l.b16 %v584
        %v597 = vunpack.c.l.b16 %v585
        %v598 = vpack.c.b16 %v595, %v594
        %v599 = vpack.c.b16 %v597, %v596
        %v603 = vsel %vm519, %v581, 0
        %605 = vmatpush.bf16.msra.mxu0 0
        %606 = vmatpush.bf16.msra.mxu0 0
        %607 = vmatpush.bf16.msra.mxu0 0
        %608 = vmatpush.bf16.msra.mxu0 0
        %609 = vmatpush.bf16.msra.mxu0 0
        %610 = vmatpush.bf16.msra.mxu0 0
        %611 = vmatpush.bf16.msra.mxu0 %v599
        %612 = vmatpush.bf16.msra.mxu0 %v598
        %613 = vmatmul.bf16.gmra.mxu0 %v603
        %v614 = vpop.f32.mrf.mxu0
        %v615 = vadd.f32 %v588, %v614
        %v616 = vpop.f32.mrf.mxu0
        %v617 = vadd.f32 %v588, %v616
        %618 = vdwg.mxu0
        %v619 = vld [vmem:[%s6] sm:$0xf]
        %v620 = vld [vmem:[%s6 + $0x4] sm:$0xf]
        %v621 = vld [vmem:[%s6 + $0x8] sm:$0xf]
        %v622 = vld [vmem:[%s6 + $0xc] sm:$0xf]
        %v623 = vld [vmem:[%s7] sm:$0x1]
        %v625 = vperm.slane %v623, 0
        %v631 = vunpack.c.l.b16 %v619
        %v632 = vunpack.c.l.b16 %v620
        %v633 = vunpack.c.l.b16 %v621
        %v634 = vunpack.c.l.b16 %v622
        %v635 = vpack.c.b16 %v632, %v631
        %v636 = vpack.c.b16 %v634, %v633
        %639 = vmatpush.bf16.msra.mxu0 0
        %640 = vmatpush.bf16.msra.mxu0 0
        %641 = vmatpush.bf16.msra.mxu0 0
        %642 = vmatpush.bf16.msra.mxu0 0
        %643 = vmatpush.bf16.msra.mxu0 0
        %644 = vmatpush.bf16.msra.mxu0 0
        %645 = vmatpush.bf16.msra.mxu0 %v636
        %646 = vmatpush.bf16.msra.mxu0 %v635
        %647 = vmatmul.bf16.gmra.mxu0 %v603
        %v648 = vpop.f32.mrf.mxu0
        %v649 = vadd.f32 %v625, %v648
        %v650 = vpop.f32.mrf.mxu0
        %v651 = vadd.f32 %v625, %v650
        %652 = vdwg.mxu0
        %v653 = vld [vmem:[%s1] sm:$0xf]
        %v654 = vpack.c.bf16 %v617, %v615
        %vm655 = vcmask 64512
        %v657 = vsel %vm655, %v653, 0
        %v660 = vsel %vm655, %v654, 0
        %662 = vmatpush.bf16.xpose.msra.mxu0 0
        %663 = vmatpush.bf16.xpose.msra.mxu0 0
        %664 = vmatpush.bf16.xpose.msra.mxu0 0
        %665 = vmatpush.bf16.xpose.msra.mxu0 0
        %666 = vmatpush.bf16.xpose.msra.mxu0 0
        %667 = vmatpush.bf16.xpose.msra.mxu0 0
        %668 = vmatpush.bf16.xpose.msra.mxu0 0
        %669 = vmatpush.bf16.xpose.msra.mxu0 %v660
        %670 = vmatmul.bf16.gmra.mxu0 %v657
        %v671 = vpop.f32.mrf.mxu0
        %v672 = vadd.f32 0.0, %v671
        %v673 = vpop.f32.mrf.mxu0
        %674 = vdwg.mxu0
        %v675 = vld [vmem:[#allocation2] sm:$0xff]
        %vm676 = vcmask 130048
        %v677 = vsel %vm676, %v672, -inf
        %678 = vmax.xlane.f32.xlu0 %v677
        %v679 = vpop.xlane.xlu0 %678
        %v680 = vmax.f32 %v675, %v679
        %v681 = vsub.f32 %v675, %v680
        %v682 = vmul.f32 %v681, 1.442695
        %v683 = vpow.pop %v682
        %685 = vset.pattern.permute.xlu0 0
        %686 = vperm.xlu0 %685, %v680
        %v687 = vpop.permute.xlu0 %686
        %v689 = vsub.f32 %v672, %v687
        %v690 = vmul.f32 %v689, 1.442695
        %v691 = vpow.pop %v690
        %v692 = vld [vmem:[#allocation3] sm:$0xff]
        %v693 = vmul.f32 %v683, %v692
        %v694 = vsel %vm676, %v691, 0.0
        %695 = vadd.xlane.f32.xlu0 %v694
        %v696 = vpop.xlane.xlu0 %695
        %v697 = vadd.f32 %v693, %v696
        %vm698 = vcmask 7168
        %699 = vst.msk [vmem:[#allocation3] sm:$0xff] %vm698, %v697
        %v700 = vld [vmem:[#allocation4] sm:$0xff]
        %702 = vset.pattern.permute.xlu0 0
        %703 = vperm.xlu0 %702, %v683
        %v704 = vpop.permute.xlu0 %703
        %v706 = vmul.f32 %v704, %v700
        %v707 = vpack.c.bf16 %v691, %v691
        %v708 = vpack.c.bf16 %v651, %v649
        %v710 = vsel %vm676, %v707, 0
        %712 = vmatpush.bf16.msra.mxu0 0
        %713 = vmatpush.bf16.msra.mxu0 0
        %714 = vmatpush.bf16.msra.mxu0 0
        %715 = vmatpush.bf16.msra.mxu0 0
        %716 = vmatpush.bf16.msra.mxu0 0
        %717 = vmatpush.bf16.msra.mxu0 0
        %718 = vmatpush.bf16.msra.mxu0 0
        %719 = vmatpush.bf16.msra.mxu0 %v708
        %720 = vmatmul.bf16.gmra.mxu0 %v710
        %v721 = vpop.f32.mrf.mxu0
        %v722 = vadd.f32 0.0, %v721
        %v723 = vpop.f32.mrf.mxu0
        %724 = vdwg.mxu0
        %v725 = vadd.f32 %v706, %v722
        %726 = vst.msk [vmem:[#allocation4] sm:$0xff] %vm655, %v725
        %727 = vst.msk [vmem:[#allocation2] sm:$0xff] %vm698, %v680
        %s728 = scalar_lea.vmem %s4, 16
        %v729 = vld [vmem:[%s728] sm:$0xf]
        %v730 = vld [vmem:[%s728 + $0x4] sm:$0xf]
        %v731 = vld [vmem:[%s728 + $0x8] sm:$0xf]
        %v732 = vld [vmem:[%s728 + $0xc] sm:$0xf]
        %s733 = scalar_lea.vmem %s5, 1
        %v734 = vld [vmem:[%s733] sm:$0x1]
        %v736 = vperm.slane %v734, 0
        %v742 = vunpack.c.l.b16 %v729
        %v743 = vunpack.c.l.b16 %v730
        %v744 = vunpack.c.l.b16 %v731
        %v745 = vunpack.c.l.b16 %v732
        %v746 = vpack.c.b16 %v743, %v742
        %v747 = vpack.c.b16 %v745, %v744
        %750 = vmatpush.bf16.msra.mxu0 0
        %751 = vmatpush.bf16.msra.mxu0 0
        %752 = vmatpush.bf16.msra.mxu0 0
        %753 = vmatpush.bf16.msra.mxu0 0
        %754 = vmatpush.bf16.msra.mxu0 0
        %755 = vmatpush.bf16.msra.mxu0 0
        %756 = vmatpush.bf16.msra.mxu0 %v747
        %757 = vmatpush.bf16.msra.mxu0 %v746
        %758 = vmatmul.bf16.gmra.mxu0 %v603
        %v759 = vpop.f32.mrf.mxu0
        %v760 = vadd.f32 %v736, %v759
        %v761 = vpop.f32.mrf.mxu0
        %v762 = vadd.f32 %v736, %v761
        %763 = vdwg.mxu0
        %s764 = scalar_lea.vmem %s6, 16
        %v765 = vld [vmem:[%s764] sm:$0xf]
        %v766 = vld [vmem:[%s764 + $0x4] sm:$0xf]
        %v767 = vld [vmem:[%s764 + $0x8] sm:$0xf]
        %v768 = vld [vmem:[%s764 + $0xc] sm:$0xf]
        %s769 = scalar_lea.vmem %s7, 1
        %v770 = vld [vmem:[%s769] sm:$0x1]
        %v772 = vperm.slane %v770, 0
        %v778 = vunpack.c.l.b16 %v765
        %v779 = vunpack.c.l.b16 %v766
        %v780 = vunpack.c.l.b16 %v767
        %v781 = vunpack.c.l.b16 %v768
        %v782 = vpack.c.b16 %v779, %v778
        %v783 = vpack.c.b16 %v781, %v780
        %786 = vmatpush.bf16.msra.mxu0 0
        %787 = vmatpush.bf16.msra.mxu0 0
        %788 = vmatpush.bf16.msra.mxu0 0
        %789 = vmatpush.bf16.msra.mxu0 0
        %790 = vmatpush.bf16.msra.mxu0 0
        %791 = vmatpush.bf16.msra.mxu0 0
        %792 = vmatpush.bf16.msra.mxu0 %v783
        %793 = vmatpush.bf16.msra.mxu0 %v782
        %794 = vmatmul.bf16.gmra.mxu0 %v603
        %v795 = vpop.f32.mrf.mxu0
        %v796 = vadd.f32 %v772, %v795
        %v797 = vpop.f32.mrf.mxu0
        %v798 = vadd.f32 %v772, %v797
        %799 = vdwg.mxu0
        %s800 = scalar_lea.vmem %s1, 4
        %v801 = vld [vmem:[%s800] sm:$0xf]
        %v802 = vpack.c.bf16 %v762, %v760
        %v804 = vsel %vm655, %v801, 0
        %v807 = vsel %vm655, %v802, 0
        %809 = vmatpush.bf16.xpose.msra.mxu0 0
        %810 = vmatpush.bf16.xpose.msra.mxu0 0
        %811 = vmatpush.bf16.xpose.msra.mxu0 0
        %812 = vmatpush.bf16.xpose.msra.mxu0 0
        %813 = vmatpush.bf16.xpose.msra.mxu0 0
        %814 = vmatpush.bf16.xpose.msra.mxu0 0
        %815 = vmatpush.bf16.xpose.msra.mxu0 0
        %816 = vmatpush.bf16.xpose.msra.mxu0 %v807
        %817 = vmatmul.bf16.gmra.mxu0 %v804
        %v818 = vpop.f32.mrf.mxu0
        %v819 = vadd.f32 0.0, %v818
        %v820 = vpop.f32.mrf.mxu0
        %821 = vdwg.mxu0
        %s822 = scalar_lea.vmem [#allocation2], 8
        %v823 = vld [vmem:[%s822] sm:$0xff]
        %v824 = vsel %vm676, %v819, -inf
        %825 = vmax.xlane.f32.xlu0 %v824
        %v826 = vpop.xlane.xlu0 %825
        %v827 = vmax.f32 %v823, %v826
        %v828 = vsub.f32 %v823, %v827
        %v829 = vmul.f32 %v828, 1.442695
        %v830 = vpow.pop %v829
        %832 = vset.pattern.permute.xlu0 0
        %833 = vperm.xlu0 %832, %v827
        %v834 = vpop.permute.xlu0 %833
        %v836 = vsub.f32 %v819, %v834
        %v837 = vmul.f32 %v836, 1.442695
        %v838 = vpow.pop %v837
        %s839 = scalar_lea.vmem [#allocation3], 8
        %v840 = vld [vmem:[%s839] sm:$0xff]
        %v841 = vmul.f32 %v830, %v840
        %v842 = vsel %vm676, %v838, 0.0
        %843 = vadd.xlane.f32.xlu0 %v842
        %v844 = vpop.xlane.xlu0 %843
        %v845 = vadd.f32 %v841, %v844
        %846 = vst.msk [vmem:[%s839] sm:$0xff] %vm698, %v845
        %s847 = scalar_lea.vmem [#allocation4], 8
        %v848 = vld [vmem:[%s847] sm:$0xff]
        %850 = vset.pattern.permute.xlu0 0
        %851 = vperm.xlu0 %850, %v830
        %v852 = vpop.permute.xlu0 %851
        %v854 = vmul.f32 %v852, %v848
        %v855 = vpack.c.bf16 %v838, %v838
        %v856 = vpack.c.bf16 %v798, %v796
        %v858 = vsel %vm676, %v855, 0
        %860 = vmatpush.bf16.msra.mxu0 0
        %861 = vmatpush.bf16.msra.mxu0 0
        %862 = vmatpush.bf16.msra.mxu0 0
        %863 = vmatpush.bf16.msra.mxu0 0
        %864 = vmatpush.bf16.msra.mxu0 0
        %865 = vmatpush.bf16.msra.mxu0 0
        %866 = vmatpush.bf16.msra.mxu0 0
        %867 = vmatpush.bf16.msra.mxu0 %v856
        %868 = vmatmul.bf16.gmra.mxu0 %v858
        %v869 = vpop.f32.mrf.mxu0
        %v870 = vadd.f32 0.0, %v869
        %v871 = vpop.f32.mrf.mxu0
        %872 = vdwg.mxu0
        %v873 = vadd.f32 %v854, %v870
        %874 = vst.msk [vmem:[%s847] sm:$0xff] %vm655, %v873
        %875 = vst.msk [vmem:[%s822] sm:$0xff] %vm698, %v827
        %s876 = scalar_lea.vmem %s4, 32
        %v877 = vld [vmem:[%s876] sm:$0xf]
        %v878 = vld [vmem:[%s876 + $0x4] sm:$0xf]
        %v879 = vld [vmem:[%s876 + $0x8] sm:$0xf]
        %v880 = vld [vmem:[%s876 + $0xc] sm:$0xf]
        %s881 = scalar_lea.vmem %s5, 2
        %v882 = vld [vmem:[%s881] sm:$0x1]
        %v884 = vperm.slane %v882, 0
        %v890 = vunpack.c.l.b16 %v877
        %v891 = vunpack.c.l.b16 %v878
        %v892 = vunpack.c.l.b16 %v879
        %v893 = vunpack.c.l.b16 %v880
        %v894 = vpack.c.b16 %v891, %v890
        %v895 = vpack.c.b16 %v893, %v892
        %898 = vmatpush.bf16.msra.mxu0 0
        %899 = vmatpush.bf16.msra.mxu0 0
        %900 = vmatpush.bf16.msra.mxu0 0
        %901 = vmatpush.bf16.msra.mxu0 0
        %902 = vmatpush.bf16.msra.mxu0 0
        %903 = vmatpush.bf16.msra.mxu0 0
        %904 = vmatpush.bf16.msra.mxu0 %v895
        %905 = vmatpush.bf16.msra.mxu0 %v894
        %906 = vmatmul.bf16.gmra.mxu0 %v603
        %v907 = vpop.f32.mrf.mxu0
        %v908 = vadd.f32 %v884, %v907
        %v909 = vpop.f32.mrf.mxu0
        %v910 = vadd.f32 %v884, %v909
        %911 = vdwg.mxu0
        %s912 = scalar_lea.vmem %s6, 32
        %v913 = vld [vmem:[%s912] sm:$0xf]
        %v914 = vld [vmem:[%s912 + $0x4] sm:$0xf]
        %v915 = vld [vmem:[%s912 + $0x8] sm:$0xf]
        %v916 = vld [vmem:[%s912 + $0xc] sm:$0xf]
        %s917 = scalar_lea.vmem %s7, 2
        %v918 = vld [vmem:[%s917] sm:$0x1]
        %v920 = vperm.slane %v918, 0
        %v926 = vunpack.c.l.b16 %v913
        %v927 = vunpack.c.l.b16 %v914
        %v928 = vunpack.c.l.b16 %v915
        %v929 = vunpack.c.l.b16 %v916
        %v930 = vpack.c.b16 %v927, %v926
        %v931 = vpack.c.b16 %v929, %v928
        %934 = vmatpush.bf16.msra.mxu0 0
        %935 = vmatpush.bf16.msra.mxu0 0
        %936 = vmatpush.bf16.msra.mxu0 0
        %937 = vmatpush.bf16.msra.mxu0 0
        %938 = vmatpush.bf16.msra.mxu0 0
        %939 = vmatpush.bf16.msra.mxu0 0
        %940 = vmatpush.bf16.msra.mxu0 %v931
        %941 = vmatpush.bf16.msra.mxu0 %v930
        %942 = vmatmul.bf16.gmra.mxu0 %v603
        %v943 = vpop.f32.mrf.mxu0
        %v944 = vadd.f32 %v920, %v943
        %v945 = vpop.f32.mrf.mxu0
        %v946 = vadd.f32 %v920, %v945
        %947 = vdwg.mxu0
        %s948 = scalar_lea.vmem %s1, 8
        %v949 = vld [vmem:[%s948] sm:$0xf]
        %v950 = vpack.c.bf16 %v910, %v908
        %v952 = vsel %vm655, %v949, 0
        %v955 = vsel %vm655, %v950, 0
        %957 = vmatpush.bf16.xpose.msra.mxu0 0
        %958 = vmatpush.bf16.xpose.msra.mxu0 0
        %959 = vmatpush.bf16.xpose.msra.mxu0 0
        %960 = vmatpush.bf16.xpose.msra.mxu0 0
        %961 = vmatpush.bf16.xpose.msra.mxu0 0
        %962 = vmatpush.bf16.xpose.msra.mxu0 0
        %963 = vmatpush.bf16.xpose.msra.mxu0 0
        %964 = vmatpush.bf16.xpose.msra.mxu0 %v955
        %965 = vmatmul.bf16.gmra.mxu0 %v952
        %v966 = vpop.f32.mrf.mxu0
        %v967 = vadd.f32 0.0, %v966
        %v968 = vpop.f32.mrf.mxu0
        %969 = vdwg.mxu0
        %s970 = scalar_lea.vmem [#allocation2], 16
        %v971 = vld [vmem:[%s970] sm:$0xff]
        %v972 = vsel %vm676, %v967, -inf
        %973 = vmax.xlane.f32.xlu0 %v972
        %v974 = vpop.xlane.xlu0 %973
        %v975 = vmax.f32 %v971, %v974
        %v976 = vsub.f32 %v971, %v975
        %v977 = vmul.f32 %v976, 1.442695
        %v978 = vpow.pop %v977
        %980 = vset.pattern.permute.xlu0 0
        %981 = vperm.xlu0 %980, %v975
        %v982 = vpop.permute.xlu0 %981
        %v984 = vsub.f32 %v967, %v982
        %v985 = vmul.f32 %v984, 1.442695
        %v986 = vpow.pop %v985
        %s987 = scalar_lea.vmem [#allocation3], 16
        %v988 = vld [vmem:[%s987] sm:$0xff]
        %v989 = vmul.f32 %v978, %v988
        %v990 = vsel %vm676, %v986, 0.0
        %991 = vadd.xlane.f32.xlu0 %v990
        %v992 = vpop.xlane.xlu0 %991
        %v993 = vadd.f32 %v989, %v992
        %994 = vst.msk [vmem:[%s987] sm:$0xff] %vm698, %v993
        %s995 = scalar_lea.vmem [#allocation4], 16
        %v996 = vld [vmem:[%s995] sm:$0xff]
        %998 = vset.pattern.permute.xlu0 0
        %999 = vperm.xlu0 %998, %v978
        %v1000 = vpop.permute.xlu0 %999
        %v1002 = vmul.f32 %v1000, %v996
        %v1003 = vpack.c.bf16 %v986, %v986
        %v1004 = vpack.c.bf16 %v946, %v944
        %v1006 = vsel %vm676, %v1003, 0
        %1008 = vmatpush.bf16.msra.mxu0 0
        %1009 = vmatpush.bf16.msra.mxu0 0
        %1010 = vmatpush.bf16.msra.mxu0 0
        %1011 = vmatpush.bf16.msra.mxu0 0
        %1012 = vmatpush.bf16.msra.mxu0 0
        %1013 = vmatpush.bf16.msra.mxu0 0
        %1014 = vmatpush.bf16.msra.mxu0 0
        %1015 = vmatpush.bf16.msra.mxu0 %v1004
        %1016 = vmatmul.bf16.gmra.mxu0 %v1006
        %v1017 = vpop.f32.mrf.mxu0
        %v1018 = vadd.f32 0.0, %v1017
        %v1019 = vpop.f32.mrf.mxu0
        %1020 = vdwg.mxu0
        %v1021 = vadd.f32 %v1002, %v1018
        %1022 = vst.msk [vmem:[%s995] sm:$0xff] %vm655, %v1021
        %1023 = vst.msk [vmem:[%s970] sm:$0xff] %vm698, %v975
        %s1024 = scalar_lea.vmem %s4, 48
        %v1025 = vld [vmem:[%s1024] sm:$0xf]
        %v1026 = vld [vmem:[%s1024 + $0x4] sm:$0xf]
        %v1027 = vld [vmem:[%s1024 + $0x8] sm:$0xf]
        %v1028 = vld [vmem:[%s1024 + $0xc] sm:$0xf]
        %s1029 = scalar_lea.vmem %s5, 3
        %v1030 = vld [vmem:[%s1029] sm:$0x1]
        %v1032 = vperm.slane %v1030, 0
        %v1038 = vunpack.c.l.b16 %v1025
        %v1039 = vunpack.c.l.b16 %v1026
        %v1040 = vunpack.c.l.b16 %v1027
        %v1041 = vunpack.c.l.b16 %v1028
        %v1042 = vpack.c.b16 %v1039, %v1038
        %v1043 = vpack.c.b16 %v1041, %v1040
        %1046 = vmatpush.bf16.msra.mxu0 0
        %1047 = vmatpush.bf16.msra.mxu0 0
        %1048 = vmatpush.bf16.msra.mxu0 0
        %1049 = vmatpush.bf16.msra.mxu0 0
        %1050 = vmatpush.bf16.msra.mxu0 0
        %1051 = vmatpush.bf16.msra.mxu0 0
        %1052 = vmatpush.bf16.msra.mxu0 %v1043
        %1053 = vmatpush.bf16.msra.mxu0 %v1042
        %1054 = vmatmul.bf16.gmra.mxu0 %v603
        %v1055 = vpop.f32.mrf.mxu0
        %v1056 = vadd.f32 %v1032, %v1055
        %v1057 = vpop.f32.mrf.mxu0
        %v1058 = vadd.f32 %v1032, %v1057
        %1059 = vdwg.mxu0
        %s1060 = scalar_lea.vmem %s6, 48
        %v1061 = vld [vmem:[%s1060] sm:$0xf]
        %v1062 = vld [vmem:[%s1060 + $0x4] sm:$0xf]
        %v1063 = vld [vmem:[%s1060 + $0x8] sm:$0xf]
        %v1064 = vld [vmem:[%s1060 + $0xc] sm:$0xf]
        %s1065 = scalar_lea.vmem %s7, 3
        %v1066 = vld [vmem:[%s1065] sm:$0x1]
        %v1068 = vperm.slane %v1066, 0
        %v1074 = vunpack.c.l.b16 %v1061
        %v1075 = vunpack.c.l.b16 %v1062
        %v1076 = vunpack.c.l.b16 %v1063
        %v1077 = vunpack.c.l.b16 %v1064
        %v1078 = vpack.c.b16 %v1075, %v1074
        %v1079 = vpack.c.b16 %v1077, %v1076
        %1082 = vmatpush.bf16.msra.mxu0 0
        %1083 = vmatpush.bf16.msra.mxu0 0
        %1084 = vmatpush.bf16.msra.mxu0 0
        %1085 = vmatpush.bf16.msra.mxu0 0
        %1086 = vmatpush.bf16.msra.mxu0 0
        %1087 = vmatpush.bf16.msra.mxu0 0
        %1088 = vmatpush.bf16.msra.mxu0 %v1079
        %1089 = vmatpush.bf16.msra.mxu0 %v1078
        %1090 = vmatmul.bf16.gmra.mxu0 %v603
        %v1091 = vpop.f32.mrf.mxu0
        %v1092 = vadd.f32 %v1068, %v1091
        %v1093 = vpop.f32.mrf.mxu0
        %v1094 = vadd.f32 %v1068, %v1093
        %1095 = vdwg.mxu0
        %s1096 = scalar_lea.vmem %s1, 12
        %v1097 = vld [vmem:[%s1096] sm:$0xf]
        %v1098 = vpack.c.bf16 %v1058, %v1056
        %v1100 = vsel %vm655, %v1097, 0
        %v1103 = vsel %vm655, %v1098, 0
        %1105 = vmatpush.bf16.xpose.msra.mxu0 0
        %1106 = vmatpush.bf16.xpose.msra.mxu0 0
        %1107 = vmatpush.bf16.xpose.msra.mxu0 0
        %1108 = vmatpush.bf16.xpose.msra.mxu0 0
        %1109 = vmatpush.bf16.xpose.msra.mxu0 0
        %1110 = vmatpush.bf16.xpose.msra.mxu0 0
        %1111 = vmatpush.bf16.xpose.msra.mxu0 0
        %1112 = vmatpush.bf16.xpose.msra.mxu0 %v1103
        %1113 = vmatmul.bf16.gmra.mxu0 %v1100
        %v1114 = vpop.f32.mrf.mxu0
        %v1115 = vadd.f32 0.0, %v1114
        %v1116 = vpop.f32.mrf.mxu0
        %1117 = vdwg.mxu0
        %s1118 = scalar_lea.vmem [#allocation2], 24
        %v1119 = vld [vmem:[%s1118] sm:$0xff]
        %v1120 = vsel %vm676, %v1115, -inf
        %1121 = vmax.xlane.f32.xlu0 %v1120
        %v1122 = vpop.xlane.xlu0 %1121
        %v1123 = vmax.f32 %v1119, %v1122
        %v1124 = vsub.f32 %v1119, %v1123
        %v1125 = vmul.f32 %v1124, 1.442695
        %v1126 = vpow.pop %v1125
        %1128 = vset.pattern.permute.xlu0 0
        %1129 = vperm.xlu0 %1128, %v1123
        %v1130 = vpop.permute.xlu0 %1129
        %v1132 = vsub.f32 %v1115, %v1130
        %v1133 = vmul.f32 %v1132, 1.442695
        %v1134 = vpow.pop %v1133
        %s1135 = scalar_lea.vmem [#allocation3], 24
        %v1136 = vld [vmem:[%s1135] sm:$0xff]
        %v1137 = vmul.f32 %v1126, %v1136
        %v1138 = vsel %vm676, %v1134, 0.0
        %1139 = vadd.xlane.f32.xlu0 %v1138
        %v1140 = vpop.xlane.xlu0 %1139
        %v1141 = vadd.f32 %v1137, %v1140
        %1142 = vst.msk [vmem:[%s1135] sm:$0xff] %vm698, %v1141
        %s1143 = scalar_lea.vmem [#allocation4], 24
        %v1144 = vld [vmem:[%s1143] sm:$0xff]
        %1146 = vset.pattern.permute.xlu0 0
        %1147 = vperm.xlu0 %1146, %v1126
        %v1148 = vpop.permute.xlu0 %1147
        %v1150 = vmul.f32 %v1148, %v1144
        %v1151 = vpack.c.bf16 %v1134, %v1134
        %v1152 = vpack.c.bf16 %v1094, %v1092
        %v1154 = vsel %vm676, %v1151, 0
        %1156 = vmatpush.bf16.msra.mxu0 0
        %1157 = vmatpush.bf16.msra.mxu0 0
        %1158 = vmatpush.bf16.msra.mxu0 0
        %1159 = vmatpush.bf16.msra.mxu0 0
        %1160 = vmatpush.bf16.msra.mxu0 0
        %1161 = vmatpush.bf16.msra.mxu0 0
        %1162 = vmatpush.bf16.msra.mxu0 0
        %1163 = vmatpush.bf16.msra.mxu0 %v1152
        %1164 = vmatmul.bf16.gmra.mxu0 %v1154
        %v1165 = vpop.f32.mrf.mxu0
        %v1166 = vadd.f32 0.0, %v1165
        %v1167 = vpop.f32.mrf.mxu0
        %1168 = vdwg.mxu0
        %v1169 = vadd.f32 %v1150, %v1166
        %1170 = vst.msk [vmem:[%s1143] sm:$0xff] %vm655, %v1169
        %1171 = vst.msk [vmem:[%s1118] sm:$0xff] %vm698, %v1123
        // Predicated region
        $region81: #{tpu_custom_call.1} parent=75 // pred_check
          %p1172 = pneg %p495
        $region82: #{tpu_custom_call.1} parent=75 // pred_check_branch
          %1174 = sbr.rel (%p1172) target = $region84
        $region83: #{tpu_custom_call.1} parent=75 // pred_region
          %v1175 = vld [vmem:[%s9] sm:$0x1]
          %v1176 = vld [vmem:[#allocation4] sm:$0xff]
          %v1177 = vld [vmem:[#allocation3] sm:$0xff]
          %v1178 = vrcp.pop %v1177
          %1180 = vset.pattern.permute.xlu0 0
          %1181 = vperm.xlu0 %1180, %v1178
          %v1182 = vpop.permute.xlu0 %1181
          %v1184 = vmul.f32 %v1176, %v1182
          %v1185 = vpack.c.bf16 %v1184, %v1184
          %v1186 = vld [vmem:[%s8] sm:$0xf]
          %v1188 = vsel %vm655, %v1185, 0
          %vm1190 = vcmask 1043456
          %v1192 = vsel %vm1190, %v1186, 0
          %1194 = vmatpush.bf16.msra.mxu0 0
          %1195 = vmatpush.bf16.msra.mxu0 0
          %1196 = vmatpush.bf16.msra.mxu0 0
          %1197 = vmatpush.bf16.msra.mxu0 0
          %1198 = vmatpush.bf16.msra.mxu0 0
          %1199 = vmatpush.bf16.msra.mxu0 0
          %1200 = vmatpush.bf16.msra.mxu0 0
          %1201 = vmatpush.bf16.msra.mxu0 %v1192
          %1202 = vmatmul.bf16.gmra.mxu0 %v1188
          %v1203 = vpop.f32.mrf.mxu0
          %v1204 = vadd.f32 0.0, %v1203
          %v1205 = vpop.f32.mrf.mxu0
          %1206 = vdwg.mxu0
          %v1208 = vperm.slane %v1175, 0
          %v1210 = vadd.f32 %v1208, %v1204
          %v1211 = vld [vmem:[%s847] sm:$0xff]
          %v1212 = vld [vmem:[%s839] sm:$0xff]
          %v1213 = vrcp.pop %v1212
          %1215 = vset.pattern.permute.xlu0 0
          %1216 = vperm.xlu0 %1215, %v1213
          %v1217 = vpop.permute.xlu0 %1216
          %v1219 = vmul.f32 %v1211, %v1217
          %v1220 = vpack.c.bf16 %v1219, %v1219
          %s1221 = scalar_lea.vmem %s8, 4
          %v1222 = vld [vmem:[%s1221] sm:$0xf]
          %v1224 = vsel %vm655, %v1220, 0
          %v1227 = vsel %vm1190, %v1222, 0
          %1229 = vmatpush.bf16.msra.mxu0 0
          %1230 = vmatpush.bf16.msra.mxu0 0
          %1231 = vmatpush.bf16.msra.mxu0 0
          %1232 = vmatpush.bf16.msra.mxu0 0
          %1233 = vmatpush.bf16.msra.mxu0 0
          %1234 = vmatpush.bf16.msra.mxu0 0
          %1235 = vmatpush.bf16.msra.mxu0 0
          %1236 = vmatpush.bf16.msra.mxu0 %v1227
          %1237 = vmatmul.bf16.gmra.mxu0 %v1224
          %v1238 = vpop.f32.mrf.mxu0
          %v1239 = vadd.f32 0.0, %v1238
          %v1240 = vpop.f32.mrf.mxu0
          %1241 = vdwg.mxu0
          %v1242 = vadd.f32 %v1210, %v1239
          %v1243 = vld [vmem:[%s995] sm:$0xff]
          %v1244 = vld [vmem:[%s987] sm:$0xff]
          %v1245 = vrcp.pop %v1244
          %1247 = vset.pattern.permute.xlu0 0
          %1248 = vperm.xlu0 %1247, %v1245
          %v1249 = vpop.permute.xlu0 %1248
          %v1251 = vmul.f32 %v1243, %v1249
          %v1252 = vpack.c.bf16 %v1251, %v1251
          %s1253 = scalar_lea.vmem %s8, 8
          %v1254 = vld [vmem:[%s1253] sm:$0xf]
          %v1256 = vsel %vm655, %v1252, 0
          %v1259 = vsel %vm1190, %v1254, 0
          %1261 = vmatpush.bf16.msra.mxu0 0
          %1262 = vmatpush.bf16.msra.mxu0 0
          %1263 = vmatpush.bf16.msra.mxu0 0
          %1264 = vmatpush.bf16.msra.mxu0 0
          %1265 = vmatpush.bf16.msra.mxu0 0
          %1266 = vmatpush.bf16.msra.mxu0 0
          %1267 = vmatpush.bf16.msra.mxu0 0
          %1268 = vmatpush.bf16.msra.mxu0 %v1259
          %1269 = vmatmul.bf16.gmra.mxu0 %v1256
          %v1270 = vpop.f32.mrf.mxu0
          %v1271 = vadd.f32 0.0, %v1270
          %v1272 = vpop.f32.mrf.mxu0
          %1273 = vdwg.mxu0
          %v1274 = vadd.f32 %v1242, %v1271
          %v1275 = vld [vmem:[%s1143] sm:$0xff]
          %v1276 = vld [vmem:[%s1135] sm:$0xff]
          %v1277 = vrcp.pop %v1276
          %1279 = vset.pattern.permute.xlu0 0
          %1280 = vperm.xlu0 %1279, %v1277
          %v1281 = vpop.permute.xlu0 %1280
          %v1283 = vmul.f32 %v1275, %v1281
          %v1284 = vpack.c.bf16 %v1283, %v1283
          %s1285 = scalar_lea.vmem %s8, 12
          %v1286 = vld [vmem:[%s1285] sm:$0xf]
          %v1288 = vsel %vm655, %v1284, 0
          %v1291 = vsel %vm1190, %v1286, 0
          %1293 = vmatpush.bf16.msra.mxu0 0
          %1294 = vmatpush.bf16.msra.mxu0 0
          %1295 = vmatpush.bf16.msra.mxu0 0
          %1296 = vmatpush.bf16.msra.mxu0 0
          %1297 = vmatpush.bf16.msra.mxu0 0
          %1298 = vmatpush.bf16.msra.mxu0 0
          %1299 = vmatpush.bf16.msra.mxu0 0
          %1300 = vmatpush.bf16.msra.mxu0 %v1291
          %1301 = vmatmul.bf16.gmra.mxu0 %v1288
          %v1302 = vpop.f32.mrf.mxu0
          %v1303 = vadd.f32 0.0, %v1302
          %v1304 = vpop.f32.mrf.mxu0
          %1305 = vdwg.mxu0
          %v1306 = vadd.f32 %v1274, %v1303
          %v1307 = vld [vmem:[%s10] sm:$0x1]
          %v1308 = vld [vmem:[%s11] sm:$0x1]
          %v1309 = vsel %vm519, %v1306, 0.0
          %1310 = vadd.xlane.f32.xlu0 %v1309
          %v1311 = vpop.xlane.xlu0 %1310
          %v1312 = vmul.f32 %v1311, %v532
          %v1313 = vsub.f32 %v1306, %v1312
          %v1314 = vmul.f32 %v1313, %v1313
          %v1315 = vsel %vm519, %v1314, 0.0
          %1316 = vadd.xlane.f32.xlu0 %v1315
          %v1317 = vpop.xlane.xlu0 %1316
          %v1318 = vmul.f32 %v1317, %v532
          %v1319 = vadd.f32 %v1318, 1e-05
          %v1320 = vrsqrt.pop %v1319
          %v1321 = vmul.f32 %v1320, %v1319
          %v1322 = vmul.f32 %v1321, %v1320
          %v1323 = vmul.f32 0.5, %v1322
          %v1324 = vsub.f32 1.5, %v1323
          %v1325 = vmul.f32 %v1320, %v1324
          %vm1326 = vweird.f32 %v1319
          %vm1327 = vweird.f32 %v1320
          %vm1328 = vmor %vm1326, %vm1327
          %v1329 = vsel %vm1328, %v1320, %v1325
          %v1330 = vmul.f32 %v1313, %v1329
          %v1332 = vperm.slane %v1307, 0
          %v1334 = vmul.f32 %v1330, %v1332
          %v1336 = vperm.slane %v1308, 0
          %v1338 = vadd.f32 %v1334, %v1336
          %v1339 = vpack.c.bf16 %v1338, %v1338
          %v1340 = vld [vmem:[%s12] sm:$0xf]
          %v1341 = vld [vmem:[%s12 + $0x4] sm:$0xf]
          %v1342 = vld [vmem:[%s12 + $0x8] sm:$0xf]
          %v1343 = vld [vmem:[%s12 + $0xc] sm:$0xf]
          %v1348 = vunpack.c.l.b16 %v1340
          %v1349 = vunpack.c.l.b16 %v1341
          %v1350 = vunpack.c.l.b16 %v1342
          %v1351 = vunpack.c.l.b16 %v1343
          %v1352 = vpack.c.b16 %v1349, %v1348
          %v1353 = vpack.c.b16 %v1351, %v1350
          %v1357 = vsel %vm519, %v1339, 0
          %1359 = vmatpush.bf16.msra.mxu0 0
          %1360 = vmatpush.bf16.msra.mxu0 0
          %1361 = vmatpush.bf16.msra.mxu0 0
          %1362 = vmatpush.bf16.msra.mxu0 0
          %1363 = vmatpush.bf16.msra.mxu0 0
          %1364 = vmatpush.bf16.msra.mxu0 0
          %1365 = vmatpush.bf16.msra.mxu0 %v1353
          %1366 = vmatpush.bf16.msra.mxu0 %v1352
          %1367 = vmatmul.bf16.gmra.mxu0 %v1357
          %v1368 = vpop.f32.mrf.mxu0
          %v1369 = vadd.f32 0.0, %v1368
          %v1370 = vpop.f32.mrf.mxu0
          %1371 = vdwg.mxu0
          %v1372 = vmul.f32 %v1369, 0.5
          %v1373 = vmul.f32 %v1369, 0.044715
          %v1374 = vmul.f32 %v1373, %v1369
          %v1375 = vmul.f32 %v1374, %v1369
          %v1376 = vadd.f32 %v1369, %v1375
          %v1377 = vmul.f32 %v1376, 0.7978845
          %v1378 = vtanh.pop %v1377
          %v1379 = vadd.f32 %v1378, 1.0
          %v1380 = vmul.f32 %v1372, %v1379
          %v1381 = vpack.c.bf16 %v1380, %v1380
          %v1382 = vld [vmem:[%s13] sm:$0xf]
          %v1383 = vld [vmem:[%s13 + $0x4] sm:$0xf]
          %v1384 = vld [vmem:[%s13 + $0x8] sm:$0xf]
          %v1385 = vld [vmem:[%s13 + $0xc] sm:$0xf]
          %v1386 = vld [vmem:[%s13 + $0x10] sm:$0xf]
          %v1387 = vld [vmem:[%s13 + $0x14] sm:$0xf]
          %v1388 = vld [vmem:[%s13 + $0x18] sm:$0xf]
          %v1389 = vld [vmem:[%s13 + $0x1c] sm:$0xf]
          %v1398 = vunpack.c.l.b16 %v1382
          %v1399 = vunpack.c.l.b16 %v1383
          %v1400 = vunpack.c.l.b16 %v1384
          %v1401 = vunpack.c.l.b16 %v1385
          %v1402 = vunpack.c.l.b16 %v1386
          %v1403 = vunpack.c.l.b16 %v1387
          %v1404 = vunpack.c.l.b16 %v1388
          %v1405 = vunpack.c.l.b16 %v1389
          %v1406 = vpack.c.b16 %v1399, %v1398
          %v1407 = vpack.c.b16 %v1401, %v1400
          %v1408 = vpack.c.b16 %v1403, %v1402
          %v1409 = vpack.c.b16 %v1405, %v1404
          %vm1414 = vcmask 523264
          %v1416 = vsel %vm1414, %v1381, 0
          %1418 = vmatpush.bf16.msra.mxu0 0
          %1419 = vmatpush.bf16.msra.mxu0 0
          %1420 = vmatpush.bf16.msra.mxu0 0
          %1421 = vmatpush.bf16.msra.mxu0 0
          %1422 = vmatpush.bf16.msra.mxu0 %v1409
          %1423 = vmatpush.bf16.msra.mxu0 %v1408
          %1424 = vmatpush.bf16.msra.mxu0 %v1407
          %1425 = vmatpush.bf16.msra.mxu0 %v1406
          %1426 = vmatmul.bf16.gmra.mxu0 %v1416
          %v1427 = vpop.f32.mrf.mxu0
          %v1428 = vadd.f32 0.0, %v1427
          %v1429 = vpop.f32.mrf.mxu0
          %1430 = vdwg.mxu0
          %1431 = vst.msk [vmem:[%s483] sm:$0xff] %vm519, %v1428
        $region84: #{tpu_custom_call.1} parent=75 // pred_fallthru
          _
        %s1432 = sand.u32 %s349, 1
        %s1433 = scalar_lea.sflag [#allocation6], %s1432
        %s1434 = sand.u32 %s349, 1
        %s1435 = smul.addr %s1434, 8
        %s1436 = scalar_lea.vmem [#allocation5], %s1435
        // Predicated region
        $region85: #{tpu_custom_call.1} parent=75 // pred_check
          %p1437 = pneg %p359
        $region86: #{tpu_custom_call.1} parent=75 // pred_check_branch
          %1439 = sbr.rel (%p1437) target = $region88
        $region87: #{tpu_custom_call.1} parent=75 // pred_region
          %1441 = vsyncadd %s1433, 0
          %s1442 = smul.addr %s32, 8
          %s1443 = scalar_lea.hbm %s14, %s1442
          %s1445 = sshll.u32 %s1436, 4
          %s1446 = int_to_ptr.vmem [resolvable:$true] %s1445
          %s1447 = sshll.u32 %s1443, 4
          %s1448 = int_to_ptr.hbm [resolvable:$true] %s1447
          %1450 = dma.vmem_to_hbm [thread:$0]  %s1446, 128, %s1448, %s1433
        $region88: #{tpu_custom_call.1} parent=75 // pred_fallthru
          _
      $region76: #{tpu_custom_call.1} parent=5 // pred_fallthru
        _
      %p1451 = scmp.le.s32.totalorder 2, %s23
      // Predicated region
      $region89: #{tpu_custom_call.1} parent=5 // pred_check
        %p1452 = pneg %p1451
      $region90: #{tpu_custom_call.1} parent=5 // pred_check_branch
        %1454 = sbr.rel (%p1452) target = $region92
      $region91: #{tpu_custom_call.1} parent=5 // pred_region
        %s1455 = ssub.s32 %s23, 2
        // Predicated region
        $region93: #{tpu_custom_call.1} parent=91 // pred_check
          %p1456 = pneg %p365
        $region94: #{tpu_custom_call.1} parent=91 // pred_check_branch
          %1458 = sbr.rel (%p1456) target = $region96
        $region95: #{tpu_custom_call.1} parent=91 // pred_region
          %s1459 = sand.u32 %s350, 1
          %s1460 = scalar_lea.sflag [#allocation6], %s1459
          %s1461 = sand.u32 %s350, 1
          %s1462 = smul.addr %s1461, 8
          %s1463 = scalar_lea.vmem [#allocation5], %s1462
          %1465 = dma.done %s1460, 128
        $region96: #{tpu_custom_call.1} parent=91 // pred_fallthru
          _
      $region92: #{tpu_custom_call.1} parent=5 // pred_fallthru
        _
    $region6: #{tpu_custom_call.1} parent=1 // loop_footer
      %s27 = sadd.s32 1, %s23
    $region7: #{tpu_custom_call.1} parent=1 // loop_footer_branch
      %22 = sbr.rel target = $region3
    $region8: #{tpu_custom_call.1} parent=1 // loop_exit
      _
    %1466 = vsyncpa [#allocation6], 1
    %s1467 = scalar_lea.sflag [#allocation6], 1
    %1468 = vsyncpa %s1467, 1

</llo_original>
